<compile_context>
chip_gen: v7x
topology: tpu7x:2x2x1
jax: 0.10.0
libtpu: 0.0.40
codegen_flags: <defaults>
</compile_context>

<pallas_src>
import jax
import jax.numpy as jnp
from jax.experimental import pallas as pl
from jax.experimental.pallas import tpu as pltpu

# ----------------------------- small config ---------------------------------
VISION_HIDDEN = 64                      # config.vision_config.hidden_size
MERGE_KERNEL = (2, 2)                   # config.vision_config.merge_kernel_size
MERGE = MERGE_KERNEL[0] * MERGE_KERNEL[1]                       # 4
PROJ_HIDDEN = VISION_HIDDEN * MERGE                             # 256
TEXT_HIDDEN = 128                       # config.text_config.hidden_size
VOCAB_SIZE = 512
IMAGE_TOKEN_ID = 7
LN_EPS = 1e-5
MAX_TM = 512                            # max rows per grid step (VMEM is ample)


# ----------------------------- Pallas kernel ---------------------------------
def _fused_projector_kernel(x_ref, m_ref, g_ref, be_ref, w1_ref, b1_ref,
                            w2_ref, b2_ref, o_ref):
    """Fused pre_norm -> linear_1 -> QuickGELU -> linear_2 for one row tile.

    x:  (tm, 256)      input dtype (flattened merge*vision_hidden, lane dense)
    m:  (256, 256)     f32   block-diagonal group-averaging matrix (1/64 blocks)
    g/be: (1, 256)     f32   LayerNorm affine, pre-tiled per 64-feature group
    w1: (256, 256)     bf16  linear_1, (in, out)
    b1: (1, 256)       f32
    w2: (256, 128)     bf16  linear_2, (in, out)
    b2: (1, 128)       f32
    o:  (tm, 128)
    """
    x = x_ref[...].astype(jnp.float32)                        # (tm, 256)
    m = m_ref[...]                                             # (256, 256)

    # --- LayerNorm over each 64-feature group ------------------------------
    # The block-averaging matmul returns the per-group mean already broadcast
    # back to all 256 lanes, so no narrow intermediates / relayouts are needed.
    mean = jnp.dot(x, m, preferred_element_type=jnp.float32)   # (tm, 256)
    cen = x - mean
    var = jnp.dot(cen * cen, m, preferred_element_type=jnp.float32)
    y = cen * jax.lax.rsqrt(var + LN_EPS)                      # EUP rsqrt
    y = y * g_ref[...] + be_ref[...]

    # --- linear_1: single K=256 dot, bf16 operands, f32 accumulation -------
    h = jnp.dot(y.astype(jnp.bfloat16), w1_ref[...],
                preferred_element_type=jnp.float32) + b1_ref[...]

    # --- QuickGELU: x * sigmoid(1.702 x); exp lands on the EUP slot --------
    h = h * jax.nn.sigmoid(1.702 * h)

    # --- linear_2 -----------------------------------------------------------
    o = jnp.dot(h.astype(jnp.bfloat16), w2_ref[...],
                preferred_element_type=jnp.float32) + b2_ref[...]
    o_ref[...] = o.astype(o_ref.dtype)


# ----------------------------- tiling helpers --------------------------------
def _round_up(n, m):
    return ((n + m - 1) // m) * m


def _tile_plan(n):
    """Rows-per-step and step count: 1 step for small batches, otherwise an
    even number of steps (balances v7x's two TensorCores) of <=~512 rows."""
    n8 = max(8, _round_up(n, 8))
    if n8 <= MAX_TM:
        return n8, 1
    steps = 2 * pl.cdiv(n8, 2 * MAX_TM)
    tm = _round_up(pl.cdiv(n8, steps), 8)
    return tm, steps


# ----------------------------- wrapper ----------------------------------------
def _projector_padded(image_features, kparams, out_dtype=jnp.float32):
    """Runs the fused projector; returns the (n_pad, TEXT_HIDDEN) padded output."""
    n, mk, hdim = image_features.shape
    assert hdim == VISION_HIDDEN and mk == MERGE

    # Lane-dense view: (N, merge, vision_hidden) -> (N, 256). Contiguous in
    # HBM, so this is free layout plumbing, not compute.
    x = image_features.reshape(n, PROJ_HIDDEN)

    tm, steps = _tile_plan(n)
    n_pad = tm * steps
    if n_pad != n:
        x = jnp.pad(x, ((0, n_pad - n), (0, 0)))

    out = pl.pallas_call(
        _fused_projector_kernel,
        out_shape=jax.ShapeDtypeStruct((n_pad, TEXT_HIDDEN), out_dtype),
        grid=(steps,),
        in_specs=[
            pl.BlockSpec((tm, PROJ_HIDDEN), lambda i: (i, 0)),
            pl.BlockSpec((PROJ_HIDDEN, PROJ_HIDDEN), lambda i: (0, 0)),
            pl.BlockSpec((1, PROJ_HIDDEN), lambda i: (0, 0)),
            pl.BlockSpec((1, PROJ_HIDDEN), lambda i: (0, 0)),
            pl.BlockSpec((PROJ_HIDDEN, PROJ_HIDDEN), lambda i: (0, 0)),
            pl.BlockSpec((1, PROJ_HIDDEN), lambda i: (0, 0)),
            pl.BlockSpec((PROJ_HIDDEN, TEXT_HIDDEN), lambda i: (0, 0)),
            pl.BlockSpec((1, TEXT_HIDDEN), lambda i: (0, 0)),
        ],
        out_specs=pl.BlockSpec((tm, TEXT_HIDDEN), lambda i: (i, 0)),
        compiler_params=pltpu.CompilerParams(
            dimension_semantics=("parallel",)),
    )(x, kparams["seg_avg"], kparams["ln_gamma"], kparams["ln_beta"],
      kparams["w1"], kparams["b1"], kparams["w2"], kparams["b2"])
    return out


def kimi_vl_multimodal_projector(image_features, kparams):
    """Faithful port of KimiVLMultiModalProjector.forward.

    image_features: (N, merge_h*merge_w, VISION_HIDDEN) -> (N, TEXT_HIDDEN) f32.
    """
    n = image_features.shape[0]
    return _projector_padded(image_features, kparams)[:n]


def kimi_vl_forward(input_ids, image_features, kparams):
    """KimiVLForConditionalGeneration.forward embedding routine (prefill side):
    token embedding lookup + image-feature substitution at placeholder tokens.
    """
    # glue: text embedding lookup
    inputs_embeds = kparams["embed_tokens"][input_ids]          # (S, TEXT_HIDDEN)
    # hot path: fused projector (single Pallas kernel, 1-2 grid steps)
    n_img = image_features.shape[0]
    image_embeds = _projector_padded(image_features, kparams)   # padded, no slice
    # glue: place image embeddings at IMAGE_TOKEN_ID slots, in order.
    # NOTE: slots beyond the available image rows are clamped to the last real
    # row (mirrors the lenient behaviour; add a debug_check if strictness is needed).
    mask = input_ids == IMAGE_TOKEN_ID
    slot = jnp.cumsum(mask.astype(jnp.int32)) - 1
    slot = jnp.clip(slot, 0, n_img - 1)
    gathered = image_embeds[slot]
    hidden = jnp.where(mask[:, None], gathered, inputs_embeds)
    # TODO(synk): DeepseekV2 decoder layers of self.language_model not implemented.
    return hidden


# ----------------------------- parameter init --------------------------------
def init_params(key):
    """Raw (torch-equivalent, f32, (in,out)-layout) parameters."""
    ks = jax.random.split(key, 8)
    scale_ln = 0.02
    return {
        "ln_gamma": jnp.ones((VISION_HIDDEN,), jnp.float32)
        + scale_ln * jax.random.normal(ks[0], (VISION_HIDDEN,), jnp.float32),
        "ln_beta": scale_ln * jax.random.normal(ks[1], (VISION_HIDDEN,), jnp.float32),
        # stored as (in, out) — transpose of torch nn.Linear layout
        "w1": (1.0 / jnp.sqrt(PROJ_HIDDEN))
        * jax.random.normal(ks[2], (PROJ_HIDDEN, PROJ_HIDDEN), jnp.float32),
        "b1": 0.01 * jax.random.normal(ks[3], (PROJ_HIDDEN,), jnp.float32),
        "w2": (1.0 / jnp.sqrt(PROJ_HIDDEN))
        * jax.random.normal(ks[4], (PROJ_HIDDEN, TEXT_HIDDEN), jnp.float32),
        "b2": 0.01 * jax.random.normal(ks[5], (TEXT_HIDDEN,), jnp.float32),
        "embed_tokens": 0.02
        * jax.random.normal(ks[6], (VOCAB_SIZE, TEXT_HIDDEN), jnp.float32),
    }


def make_kernel_params(params):
    """One-time conversion to kernel-ready layouts/dtypes (no per-forward casts)."""
    idx = jnp.arange(PROJ_HIDDEN)
    seg_avg = (idx[:, None] // VISION_HIDDEN == idx[None, :] // VISION_HIDDEN)
    seg_avg = seg_avg.astype(jnp.float32) / VISION_HIDDEN        # (256, 256)
    return {
        "seg_avg": seg_avg,
        "ln_gamma": jnp.tile(params["ln_gamma"], MERGE)
        .reshape(1, PROJ_HIDDEN).astype(jnp.float32),
        "ln_beta": jnp.tile(params["ln_beta"], MERGE)
        .reshape(1, PROJ_HIDDEN).astype(jnp.float32),
        "w1": params["w1"].astype(jnp.bfloat16),
        "b1": params["b1"].reshape(1, PROJ_HIDDEN).astype(jnp.float32),
        "w2": params["w2"].astype(jnp.bfloat16),
        "b2": params["b2"].reshape(1, TEXT_HIDDEN).astype(jnp.float32),
        "embed_tokens": params["embed_tokens"],
    }


# ----------------------------- reference (pure JAX) ---------------------------
def _reference_projector(image_features, params):
    """Pure-JAX reference: exact f32 LayerNorm, bf16 matmul operands with f32
    accumulation (same precision policy as the kernel's big matmuls)."""
    x = image_features.astype(jnp.float32)                       # (N, 4, 64)
    mean = x.mean(-1, keepdims=True)
    var = ((x - mean) ** 2).mean(-1, keepdims=True)
    x = (x - mean) * jax.lax.rsqrt(var + LN_EPS)
    x = x * params["ln_gamma"] + params["ln_beta"]
    x = x.reshape(-1, PROJ_HIDDEN)
    h = jnp.dot(x.astype(jnp.bfloat16), params["w1"].astype(jnp.bfloat16),
                preferred_element_type=jnp.float32) + params["b1"]
    h = h * jax.nn.sigmoid(1.702 * h)
    o = jnp.dot(h.astype(jnp.bfloat16), params["w2"].astype(jnp.bfloat16),
                preferred_element_type=jnp.float32) + params["b2"]
    return o


# ----------------------------- main -------------------------------------------
if __name__ == "__main__":
    key = jax.random.PRNGKey(0)
    kp, kf, ki = jax.random.split(key, 3)
    params = init_params(kp)
    kparams = make_kernel_params(params)

    # Up to 700 merged image tokens, each from 2x2 merged vision patches of dim 64.
    N_MAX = 700
    all_features = jax.random.normal(kf, (N_MAX, MERGE, VISION_HIDDEN), jnp.float32)

    # forward: sequence of 384 tokens, the first 300 of which are image placeholders
    N_IMG = 300
    SEQ = 384
    image_features = all_features[:N_IMG]
    text_ids = jax.random.randint(ki, (SEQ,), 8, VOCAB_SIZE)
    is_image = jnp.arange(SEQ) < N_IMG
    input_ids = jnp.where(is_image, IMAGE_TOKEN_ID, text_ids).astype(jnp.int32)

    out = kimi_vl_forward(input_ids, image_features, kparams)
    out = jax.block_until_ready(out)
    assert out.shape == (SEQ, TEXT_HIDDEN)

    # correctness of the fused Pallas projector vs. pure-JAX reference:
    #  - N_IMG=300 -> single 304-row grid step
    #  - 5         -> tiny-batch / padding path (tm=8, grid=1)
    #  - 700       -> multi-step path (even grid of 2 for v7x core balance)
    for n_test in (N_IMG, 5, N_MAX):
        feats = all_features[:n_test]
        proj_pallas = jax.block_until_ready(
            kimi_vl_multimodal_projector(feats, kparams)
        )
        proj_ref = _reference_projector(feats, params)
        assert proj_pallas.shape == (n_test, TEXT_HIDDEN)
        err = float(jnp.max(jnp.abs(proj_pallas - proj_ref)))
        assert jnp.allclose(proj_pallas, proj_ref, atol=3e-3, rtol=3e-3), err

    print("KERNEL_OK")
</pallas_src>

<mosaic_0001>
module attributes {stable_mosaic.version = 11 : i64} {
  func.func @_fused_projector_kernel(%arg0: i32, %arg1: memref<304x256xf32, #tpu.memory_space<vmem>>, %arg2: memref<256x256xf32, #tpu.memory_space<vmem>>, %arg3: memref<1x256xf32, #tpu.memory_space<vmem>>, %arg4: memref<1x256xf32, #tpu.memory_space<vmem>>, %arg5: memref<256x256xbf16, #tpu.memory_space<vmem>>, %arg6: memref<1x256xf32, #tpu.memory_space<vmem>>, %arg7: memref<256x128xbf16, #tpu.memory_space<vmem>>, %arg8: memref<1x128xf32, #tpu.memory_space<vmem>>, %arg9: memref<304x128xf32, #tpu.memory_space<vmem>>) attributes {dimension_semantics = [#tpu.dimension_semantics<parallel>], iteration_bounds = array<i64: 1>, scalar_prefetch = 0 : i64, scratch_operands = 0 : i64, tpu.core_type = #tpu.core_type<tc>, window_params = [{transform_indices = @transform_0, window_bounds = array<i64: 304, 256>}, {pipeline_mode = #tpu.pipeline_mode<synchronous>, transform_indices = @transform_1, window_bounds = array<i64: 256, 256>}, {pipeline_mode = #tpu.pipeline_mode<synchronous>, transform_indices = @transform_2, window_bounds = array<i64: 1, 256>}, {pipeline_mode = #tpu.pipeline_mode<synchronous>, transform_indices = @transform_3, window_bounds = array<i64: 1, 256>}, {pipeline_mode = #tpu.pipeline_mode<synchronous>, transform_indices = @transform_4, window_bounds = array<i64: 256, 256>}, {pipeline_mode = #tpu.pipeline_mode<synchronous>, transform_indices = @transform_5, window_bounds = array<i64: 1, 256>}, {pipeline_mode = #tpu.pipeline_mode<synchronous>, transform_indices = @transform_6, window_bounds = array<i64: 256, 128>}, {pipeline_mode = #tpu.pipeline_mode<synchronous>, transform_indices = @transform_7, window_bounds = array<i64: 1, 128>}, {transform_indices = @transform_8, window_bounds = array<i64: 304, 128>}]} {
    %c0 = arith.constant 0 : index
    %c0_0 = arith.constant 0 : index
    %0 = vector.load %arg1[%c0, %c0_0] : memref<304x256xf32, #tpu.memory_space<vmem>>, vector<304x256xf32>
    %c0_1 = arith.constant 0 : index
    %c0_2 = arith.constant 0 : index
    %1 = vector.load %arg2[%c0_1, %c0_2] : memref<256x256xf32, #tpu.memory_space<vmem>>, vector<256x256xf32>
    %cst = arith.constant dense<0.000000e+00> : vector<304x256xf32>
    %2 = tpu.matmul %0, %1, %cst {dimension_numbers = #tpu.dot_dimension_numbers<[1], [0], [0], [1], [0, 0, 1, 1], [], []>} : vector<304x256xf32>, vector<256x256xf32>, vector<304x256xf32> -> vector<304x256xf32>
    %3 = arith.subf %0, %2 : vector<304x256xf32>
    %4 = arith.mulf %3, %3 : vector<304x256xf32>
    %cst_3 = arith.constant dense<0.000000e+00> : vector<304x256xf32>
    %5 = tpu.matmul %4, %1, %cst_3 {dimension_numbers = #tpu.dot_dimension_numbers<[1], [0], [0], [1], [0, 0, 1, 1], [], []>} : vector<304x256xf32>, vector<256x256xf32>, vector<304x256xf32> -> vector<304x256xf32>
    %cst_4 = arith.constant 9.99999974E-6 : f32
    %6 = vector.broadcast %cst_4 : f32 to vector<304x256xf32>
    %7 = arith.addf %5, %6 : vector<304x256xf32>
    %8 = math.rsqrt %7 : vector<304x256xf32>
    %9 = arith.mulf %3, %8 : vector<304x256xf32>
    %c0_5 = arith.constant 0 : index
    %c0_6 = arith.constant 0 : index
    %10 = vector.load %arg3[%c0_5, %c0_6] : memref<1x256xf32, #tpu.memory_space<vmem>>, vector<1x256xf32>
    %11 = vector.broadcast %10 : vector<1x256xf32> to vector<304x256xf32>
    %12 = arith.mulf %9, %11 : vector<304x256xf32>
    %c0_7 = arith.constant 0 : index
    %c0_8 = arith.constant 0 : index
    %13 = vector.load %arg4[%c0_7, %c0_8] : memref<1x256xf32, #tpu.memory_space<vmem>>, vector<1x256xf32>
    %14 = vector.broadcast %13 : vector<1x256xf32> to vector<304x256xf32>
    %15 = arith.addf %12, %14 : vector<304x256xf32>
    %16 = arith.truncf %15 : vector<304x256xf32> to vector<304x256xbf16>
    %c0_9 = arith.constant 0 : index
    %c0_10 = arith.constant 0 : index
    %17 = vector.load %arg5[%c0_9, %c0_10] : memref<256x256xbf16, #tpu.memory_space<vmem>>, vector<256x256xbf16>
    %cst_11 = arith.constant dense<0.000000e+00> : vector<304x256xf32>
    %18 = tpu.matmul %16, %17, %cst_11 {dimension_numbers = #tpu.dot_dimension_numbers<[1], [0], [0], [1], [0, 0, 1, 1], [], []>} : vector<304x256xbf16>, vector<256x256xbf16>, vector<304x256xf32> -> vector<304x256xf32>
    %c0_12 = arith.constant 0 : index
    %c0_13 = arith.constant 0 : index
    %19 = vector.load %arg6[%c0_12, %c0_13] : memref<1x256xf32, #tpu.memory_space<vmem>>, vector<1x256xf32>
    %20 = vector.broadcast %19 : vector<1x256xf32> to vector<304x256xf32>
    %21 = arith.addf %18, %20 : vector<304x256xf32>
    %cst_14 = arith.constant 1.702000e+00 : f32
    %22 = vector.broadcast %cst_14 : f32 to vector<304x256xf32>
    %23 = arith.mulf %22, %21 : vector<304x256xf32>
    %24 = arith.negf %23 : vector<304x256xf32>
    %25 = math.exp %24 : vector<304x256xf32>
    %cst_15 = arith.constant 1.000000e+00 : f32
    %26 = vector.broadcast %cst_15 : f32 to vector<304x256xf32>
    %27 = arith.addf %26, %25 : vector<304x256xf32>
    %28 = arith.divf %26, %27 : vector<304x256xf32>
    %29 = arith.mulf %21, %28 : vector<304x256xf32>
    %30 = arith.truncf %29 : vector<304x256xf32> to vector<304x256xbf16>
    %c0_16 = arith.constant 0 : index
    %c0_17 = arith.constant 0 : index
    %31 = vector.load %arg7[%c0_16, %c0_17] : memref<256x128xbf16, #tpu.memory_space<vmem>>, vector<256x128xbf16>
    %cst_18 = arith.constant dense<0.000000e+00> : vector<304x128xf32>
    %32 = tpu.matmul %30, %31, %cst_18 {dimension_numbers = #tpu.dot_dimension_numbers<[1], [0], [0], [1], [0, 0, 1, 1], [], []>} : vector<304x256xbf16>, vector<256x128xbf16>, vector<304x128xf32> -> vector<304x128xf32>
    %c0_19 = arith.constant 0 : index
    %c0_20 = arith.constant 0 : index
    %33 = vector.load %arg8[%c0_19, %c0_20] : memref<1x128xf32, #tpu.memory_space<vmem>>, vector<1x128xf32>
    %34 = vector.broadcast %33 : vector<1x128xf32> to vector<304x128xf32>
    %35 = arith.addf %32, %34 : vector<304x128xf32>
    %c0_21 = arith.constant 0 : index
    %c0_22 = arith.constant 0 : index
    %36 = vector.load %arg9[%c0_21, %c0_22] : memref<304x128xf32, #tpu.memory_space<vmem>>, vector<304x128xf32>
    tpu.vector_store %arg9[%c0_21, %c0_22], %35 {strides = array<i32>} : memref<304x128xf32, #tpu.memory_space<vmem>>, vector<304x128xf32>,
    return
  }
  func.func @transform_0(%arg0: i32) -> (i32, i32) {
    %c0_i32 = arith.constant 0 : i32
    %c0_i32_0 = arith.constant 0 : i32
    return %arg0, %c0_i32 : i32, i32
  }
  func.func @transform_1(%arg0: i32) -> (i32, i32) {
    %c0_i32 = arith.constant 0 : i32
    %c0_i32_0 = arith.constant 0 : i32
    %c0_i32_1 = arith.constant 0 : i32
    return %c0_i32, %c0_i32_0 : i32, i32
  }
  func.func @transform_2(%arg0: i32) -> (i32, i32) {
    %c0_i32 = arith.constant 0 : i32
    %c0_i32_0 = arith.constant 0 : i32
    %c0_i32_1 = arith.constant 0 : i32
    return %c0_i32, %c0_i32_0 : i32, i32
  }
  func.func @transform_3(%arg0: i32) -> (i32, i32) {
    %c0_i32 = arith.constant 0 : i32
    %c0_i32_0 = arith.constant 0 : i32
    %c0_i32_1 = arith.constant 0 : i32
    return %c0_i32, %c0_i32_0 : i32, i32
  }
  func.func @transform_4(%arg0: i32) -> (i32, i32) {
    %c0_i32 = arith.constant 0 : i32
    %c0_i32_0 = arith.constant 0 : i32
    %c0_i32_1 = arith.constant 0 : i32
    return %c0_i32, %c0_i32_0 : i32, i32
  }
  func.func @transform_5(%arg0: i32) -> (i32, i32) {
    %c0_i32 = arith.constant 0 : i32
    %c0_i32_0 = arith.constant 0 : i32
    %c0_i32_1 = arith.constant 0 : i32
    return %c0_i32, %c0_i32_0 : i32, i32
  }
  func.func @transform_6(%arg0: i32) -> (i32, i32) {
    %c0_i32 = arith.constant 0 : i32
    %c0_i32_0 = arith.constant 0 : i32
    %c0_i32_1 = arith.constant 0 : i32
    return %c0_i32, %c0_i32_0 : i32, i32
  }
  func.func @transform_7(%arg0: i32) -> (i32, i32) {
    %c0_i32 = arith.constant 0 : i32
    %c0_i32_0 = arith.constant 0 : i32
    %c0_i32_1 = arith.constant 0 : i32
    return %c0_i32, %c0_i32_0 : i32, i32
  }
  func.func @transform_8(%arg0: i32) -> (i32, i32) {
    %c0_i32 = arith.constant 0 : i32
    %c0_i32_0 = arith.constant 0 : i32
    return %arg0, %c0_i32 : i32, i32
  }
}

</mosaic_0001>

<llo_original>
// kernel: tpu_custom_call.1
$region0: #{tpu_custom_call.1}
  #allocation0 [shape = 'u32[]', space=smem, size = 0x4, offset = 0x4, fixed_abs, tag = 'smem constant byte address 0x4 - core index']
  #allocation1 [shape = 'u32[144,128]{1,0:T(1,128)}', space=vmem, size = 0x12000, scoped, tag = 'internal scratch']
  %s0 = inlined_call_operand.hbm [shape: f32[304,256], index: 0, kind: input, shape index: {}]
  %s1 = inlined_call_operand.hbm [shape: f32[256,256], index: 1, kind: input, shape index: {}]
  %s2 = inlined_call_operand.vmem [shape: f32[1,256], index: 2, kind: input, shape index: {}]
  %s3 = inlined_call_operand.vmem [shape: f32[1,256], index: 3, kind: input, shape index: {}]
  %s4 = inlined_call_operand.hbm [shape: bf16[256,256], index: 4, kind: input, shape index: {}]
  %s5 = inlined_call_operand.vmem [shape: f32[1,256], index: 5, kind: input, shape index: {}]
  %s6 = inlined_call_operand.hbm [shape: bf16[256,128], index: 6, kind: input, shape index: {}]
  %s7 = inlined_call_operand.vmem [shape: f32[1,128], index: 7, kind: input, shape index: {}]
  %s8 = inlined_call_operand.hbm [shape: f32[304,128], index: 8, kind: output, shape index: {}]
  %s9 = sld [smem:[#allocation0]]
  $region58: #{tpu_custom_call.1} parent=0
    _
  %s11 = ssub.s32 1, %s9
  %s12 = scalar_select 0, %s11, %s9
  $region1: #{tpu_custom_call.1} parent=0
    #allocation2 [shape = 'u8[311296]{0}', space=vmem, size = 0x4c000, scoped, tag = 'input window, operand 0, single buffered']
    #allocation3 [shape = 's32[1]{0}', space=sflag, size = 0x4, scoped, tag = 'scoped memory for tpu_custom_call.1']
    #allocation4 [shape = 's32[1]{0}', space=sflag, size = 0x4, scoped, tag = 'scoped memory for tpu_custom_call.1']
    #allocation5 [shape = 'u8[262144]{0}', space=vmem, size = 0x40000, scoped, tag = 'input window, operand 1, single buffered']
    #allocation6 [shape = 's32[1]{0}', space=sflag, size = 0x4, scoped, tag = 'scoped memory for tpu_custom_call.1']
    #allocation7 [shape = 'u8[131072]{0}', space=vmem, size = 0x20000, scoped, tag = 'input window, operand 4, single buffered']
    #allocation8 [shape = 'u8[65536]{0}', space=vmem, size = 0x10000, scoped, tag = 'input window, operand 6, single buffered']
    #allocation9 [shape = 's32[1]{0}', space=sflag, size = 0x4, scoped, tag = 'scoped memory for tpu_custom_call.1']
    #allocation10 [shape = 'u8[155648]{0}', space=vmem, size = 0x26000, scoped, tag = 'output window, operand 0, single buffered']
    %13 = vsyncpa [#allocation3], 0
    %14 = vsyncpa [#allocation6], 0
    %15 = vsyncpa [#allocation9], 0
    %16 = vsyncpa [#allocation4], 0
    // Predicated region
    $region2: #{tpu_custom_call.1} parent=1 // pred_check
      _
    $region3: #{tpu_custom_call.1} parent=1 // pred_check_branch
      %18 = sbr.rel (0) target = $region5
    $region4: #{tpu_custom_call.1} parent=1 // pred_region
      %s20 = ssub.s32 9728, 9728
      %21 = vsyncadd [#allocation3], %s20
      %s22 = sshll.u32 [#allocation2], 4
      %s23 = int_to_ptr.vmem [resolvable:$true] %s22
      %28 = dma.hbm_to_vmem [thread:$0]  %s0, 9728, %s23, [#allocation3], 256, 256, 16
    $region5: #{tpu_custom_call.1} parent=1 // pred_fallthru
      _
    // Predicated region
    $region6: #{tpu_custom_call.1} parent=1 // pred_check
      _
    $region7: #{tpu_custom_call.1} parent=1 // pred_check_branch
      %30 = sbr.rel (0) target = $region9
    $region8: #{tpu_custom_call.1} parent=1 // pred_region
      %s32 = ssub.s32 8192, 8192
      %33 = vsyncadd [#allocation6], %s32
      %s34 = sshll.u32 [#allocation5], 4
      %s35 = int_to_ptr.vmem [resolvable:$true] %s34
      %40 = dma.hbm_to_vmem [thread:$0]  %s1, 8192, %s35, [#allocation6], 256, 256, 16
    $region9: #{tpu_custom_call.1} parent=1 // pred_fallthru
      _
    // Predicated region
    $region10: #{tpu_custom_call.1} parent=1 // pred_check
      _
    $region11: #{tpu_custom_call.1} parent=1 // pred_check_branch
      %42 = sbr.rel (0) target = $region13
    $region12: #{tpu_custom_call.1} parent=1 // pred_region
      _
    $region13: #{tpu_custom_call.1} parent=1 // pred_fallthru
      _
    // Predicated region
    $region14: #{tpu_custom_call.1} parent=1 // pred_check
      _
    $region15: #{tpu_custom_call.1} parent=1 // pred_check_branch
      %44 = sbr.rel (0) target = $region17
    $region16: #{tpu_custom_call.1} parent=1 // pred_region
      _
    $region17: #{tpu_custom_call.1} parent=1 // pred_fallthru
      _
    // Predicated region
    $region18: #{tpu_custom_call.1} parent=1 // pred_check
      _
    $region19: #{tpu_custom_call.1} parent=1 // pred_check_branch
      %46 = sbr.rel (0) target = $region21
    $region20: #{tpu_custom_call.1} parent=1 // pred_region
      %s48 = ssub.s32 4096, 4096
      %49 = vsyncadd [#allocation6], %s48
      %s50 = sshll.u32 [#allocation7], 4
      %s51 = int_to_ptr.vmem [resolvable:$true] %s50
      %56 = dma.hbm_to_vmem [thread:$0]  %s4, 4096, %s51, [#allocation6], 128, 128, 8
    $region21: #{tpu_custom_call.1} parent=1 // pred_fallthru
      _
    // Predicated region
    $region22: #{tpu_custom_call.1} parent=1 // pred_check
      _
    $region23: #{tpu_custom_call.1} parent=1 // pred_check_branch
      %58 = sbr.rel (0) target = $region25
    $region24: #{tpu_custom_call.1} parent=1 // pred_region
      _
    $region25: #{tpu_custom_call.1} parent=1 // pred_fallthru
      _
    // Predicated region
    $region26: #{tpu_custom_call.1} parent=1 // pred_check
      _
    $region27: #{tpu_custom_call.1} parent=1 // pred_check_branch
      %60 = sbr.rel (0) target = $region29
    $region28: #{tpu_custom_call.1} parent=1 // pred_region
      %s62 = ssub.s32 2048, 2048
      %63 = vsyncadd [#allocation9], %s62
      %s64 = sshll.u32 [#allocation8], 4
      %s65 = int_to_ptr.vmem [resolvable:$true] %s64
      %70 = dma.hbm_to_vmem [thread:$0]  %s6, 2048, %s65, [#allocation9], 64, 64, 4
    $region29: #{tpu_custom_call.1} parent=1 // pred_fallthru
      _
    // Predicated region
    $region30: #{tpu_custom_call.1} parent=1 // pred_check
      _
    $region31: #{tpu_custom_call.1} parent=1 // pred_check_branch
      %72 = sbr.rel (0) target = $region33
    $region32: #{tpu_custom_call.1} parent=1 // pred_region
      _
    $region33: #{tpu_custom_call.1} parent=1 // pred_fallthru
      _
    // Predicated region
    $region34: #{tpu_custom_call.1} parent=1 // pred_check
      _
    $region35: #{tpu_custom_call.1} parent=1 // pred_check_branch
      %74 = sbr.rel (0) target = $region37
    $region36: #{tpu_custom_call.1} parent=1 // pred_region
      %75 = dma.done [#allocation3], 9728
    $region37: #{tpu_custom_call.1} parent=1 // pred_fallthru
      _
    // Predicated region
    $region38: #{tpu_custom_call.1} parent=1 // pred_check
      _
    $region39: #{tpu_custom_call.1} parent=1 // pred_check_branch
      %77 = sbr.rel (0) target = $region41
    $region40: #{tpu_custom_call.1} parent=1 // pred_region
      %78 = dma.done [#allocation6], 8192
    $region41: #{tpu_custom_call.1} parent=1 // pred_fallthru
      _
    // Predicated region
    $region42: #{tpu_custom_call.1} parent=1 // pred_check
      _
    $region43: #{tpu_custom_call.1} parent=1 // pred_check_branch
      %80 = sbr.rel (0) target = $region45
    $region44: #{tpu_custom_call.1} parent=1 // pred_region
      %81 = dma.done [#allocation6], 4096
    $region45: #{tpu_custom_call.1} parent=1 // pred_fallthru
      _
    // Predicated region
    $region46: #{tpu_custom_call.1} parent=1 // pred_check
      _
    $region47: #{tpu_custom_call.1} parent=1 // pred_check_branch
      %83 = sbr.rel (0) target = $region49
    $region48: #{tpu_custom_call.1} parent=1 // pred_region
      %84 = dma.done [#allocation9], 2048
    $region49: #{tpu_custom_call.1} parent=1 // pred_fallthru
      _
    %v86 = vld [vmem:[#allocation2] sm:$0xff]
    %v87 = vld [vmem:[#allocation2 + $0x8] sm:$0xff]
    %v88 = vld [vmem:[#allocation2 + $0x10] sm:$0xff]
    %v89 = vld [vmem:[#allocation2 + $0x18] sm:$0xff]
    %v90 = vld [vmem:[#allocation2 + $0x20] sm:$0xff]
    %v91 = vld [vmem:[#allocation2 + $0x28] sm:$0xff]
    %v92 = vld [vmem:[#allocation2 + $0x30] sm:$0xff]
    %v93 = vld [vmem:[#allocation2 + $0x38] sm:$0xff]
    %v94 = vld [vmem:[#allocation2 + $0x40] sm:$0xff]
    %v95 = vld [vmem:[#allocation2 + $0x48] sm:$0xff]
    %v96 = vld [vmem:[#allocation2 + $0x50] sm:$0xff]
    %v97 = vld [vmem:[#allocation2 + $0x58] sm:$0xff]
    %v98 = vld [vmem:[#allocation2 + $0x60] sm:$0xff]
    %v99 = vld [vmem:[#allocation2 + $0x68] sm:$0xff]
    %v100 = vld [vmem:[#allocation2 + $0x70] sm:$0xff]
    %v101 = vld [vmem:[#allocation2 + $0x78] sm:$0xff]
    %v102 = vld [vmem:[#allocation2 + $0x80] sm:$0xff]
    %v103 = vld [vmem:[#allocation2 + $0x88] sm:$0xff]
    %v104 = vld [vmem:[#allocation2 + $0x90] sm:$0xff]
    %v105 = vld [vmem:[#allocation2 + $0x98] sm:$0xff]
    %v106 = vld [vmem:[#allocation2 + $0xa0] sm:$0xff]
    %v107 = vld [vmem:[#allocation2 + $0xa8] sm:$0xff]
    %v108 = vld [vmem:[#allocation2 + $0xb0] sm:$0xff]
    %v109 = vld [vmem:[#allocation2 + $0xb8] sm:$0xff]
    %v110 = vld [vmem:[#allocation2 + $0xc0] sm:$0xff]
    %v111 = vld [vmem:[#allocation2 + $0xc8] sm:$0xff]
    %v112 = vld [vmem:[#allocation2 + $0xd0] sm:$0xff]
    %v113 = vld [vmem:[#allocation2 + $0xd8] sm:$0xff]
    %v114 = vld [vmem:[#allocation2 + $0xe0] sm:$0xff]
    %v115 = vld [vmem:[#allocation2 + $0xe8] sm:$0xff]
    %v116 = vld [vmem:[#allocation2 + $0xf0] sm:$0xff]
    %v117 = vld [vmem:[#allocation2 + $0xf8] sm:$0xff]
    %v118 = vld [vmem:[#allocation2 + $0x100] sm:$0xff]
    %v119 = vld [vmem:[#allocation2 + $0x108] sm:$0xff]
    %v120 = vld [vmem:[#allocation2 + $0x110] sm:$0xff]
    %v121 = vld [vmem:[#allocation2 + $0x118] sm:$0xff]
    %v122 = vld [vmem:[#allocation2 + $0x120] sm:$0xff]
    %v123 = vld [vmem:[#allocation2 + $0x128] sm:$0xff]
    %v124 = vld [vmem:[#allocation2 + $0x130] sm:$0xff]
    %v125 = vld [vmem:[#allocation2 + $0x138] sm:$0xff]
    %v126 = vld [vmem:[#allocation2 + $0x140] sm:$0xff]
    %v127 = vld [vmem:[#allocation2 + $0x148] sm:$0xff]
    %v128 = vld [vmem:[#allocation2 + $0x150] sm:$0xff]
    %v129 = vld [vmem:[#allocation2 + $0x158] sm:$0xff]
    %v130 = vld [vmem:[#allocation2 + $0x160] sm:$0xff]
    %v131 = vld [vmem:[#allocation2 + $0x168] sm:$0xff]
    %v132 = vld [vmem:[#allocation2 + $0x170] sm:$0xff]
    %v133 = vld [vmem:[#allocation2 + $0x178] sm:$0xff]
    %v134 = vld [vmem:[#allocation2 + $0x180] sm:$0xff]
    %v135 = vld [vmem:[#allocation2 + $0x188] sm:$0xff]
    %v136 = vld [vmem:[#allocation2 + $0x190] sm:$0xff]
    %v137 = vld [vmem:[#allocation2 + $0x198] sm:$0xff]
    %v138 = vld [vmem:[#allocation2 + $0x1a0] sm:$0xff]
    %v139 = vld [vmem:[#allocation2 + $0x1a8] sm:$0xff]
    %v140 = vld [vmem:[#allocation2 + $0x1b0] sm:$0xff]
    %v141 = vld [vmem:[#allocation2 + $0x1b8] sm:$0xff]
    %v142 = vld [vmem:[#allocation2 + $0x1c0] sm:$0xff]
    %v143 = vld [vmem:[#allocation2 + $0x1c8] sm:$0xff]
    %v144 = vld [vmem:[#allocation2 + $0x1d0] sm:$0xff]
    %v145 = vld [vmem:[#allocation2 + $0x1d8] sm:$0xff]
    %v146 = vld [vmem:[#allocation2 + $0x1e0] sm:$0xff]
    %v147 = vld [vmem:[#allocation2 + $0x1e8] sm:$0xff]
    %v148 = vld [vmem:[#allocation2 + $0x1f0] sm:$0xff]
    %v149 = vld [vmem:[#allocation2 + $0x1f8] sm:$0xff]
    %v150 = vld [vmem:[#allocation2 + $0x200] sm:$0xff]
    %v151 = vld [vmem:[#allocation2 + $0x208] sm:$0xff]
    %v152 = vld [vmem:[#allocation2 + $0x210] sm:$0xff]
    %v153 = vld [vmem:[#allocation2 + $0x218] sm:$0xff]
    %v154 = vld [vmem:[#allocation2 + $0x220] sm:$0xff]
    %v155 = vld [vmem:[#allocation2 + $0x228] sm:$0xff]
    %v156 = vld [vmem:[#allocation2 + $0x230] sm:$0xff]
    %v157 = vld [vmem:[#allocation2 + $0x238] sm:$0xff]
    %v158 = vld [vmem:[#allocation2 + $0x240] sm:$0xff]
    %v159 = vld [vmem:[#allocation2 + $0x248] sm:$0xff]
    %v160 = vld [vmem:[#allocation2 + $0x250] sm:$0xff]
    %v161 = vld [vmem:[#allocation2 + $0x258] sm:$0xff]
    %v162 = vld [vmem:[#allocation5] sm:$0xff]
    %v163 = vld [vmem:[#allocation5 + $0x8] sm:$0xff]
    %v164 = vld [vmem:[#allocation5 + $0x10] sm:$0xff]
    %v165 = vld [vmem:[#allocation5 + $0x18] sm:$0xff]
    %v166 = vld [vmem:[#allocation5 + $0x20] sm:$0xff]
    %v167 = vld [vmem:[#allocation5 + $0x28] sm:$0xff]
    %v168 = vld [vmem:[#allocation5 + $0x30] sm:$0xff]
    %v169 = vld [vmem:[#allocation5 + $0x38] sm:$0xff]
    %v170 = vld [vmem:[#allocation5 + $0x40] sm:$0xff]
    %v171 = vld [vmem:[#allocation5 + $0x48] sm:$0xff]
    %v172 = vld [vmem:[#allocation5 + $0x50] sm:$0xff]
    %v173 = vld [vmem:[#allocation5 + $0x58] sm:$0xff]
    %v174 = vld [vmem:[#allocation5 + $0x60] sm:$0xff]
    %v175 = vld [vmem:[#allocation5 + $0x68] sm:$0xff]
    %v176 = vld [vmem:[#allocation5 + $0x70] sm:$0xff]
    %v177 = vld [vmem:[#allocation5 + $0x78] sm:$0xff]
    %v178 = vld [vmem:[#allocation5 + $0x80] sm:$0xff]
    %v179 = vld [vmem:[#allocation5 + $0x88] sm:$0xff]
    %v180 = vld [vmem:[#allocation5 + $0x90] sm:$0xff]
    %v181 = vld [vmem:[#allocation5 + $0x98] sm:$0xff]
    %v182 = vld [vmem:[#allocation5 + $0xa0] sm:$0xff]
    %v183 = vld [vmem:[#allocation5 + $0xa8] sm:$0xff]
    %v184 = vld [vmem:[#allocation5 + $0xb0] sm:$0xff]
    %v185 = vld [vmem:[#allocation5 + $0xb8] sm:$0xff]
    %v186 = vld [vmem:[#allocation5 + $0xc0] sm:$0xff]
    %v187 = vld [vmem:[#allocation5 + $0xc8] sm:$0xff]
    %v188 = vld [vmem:[#allocation5 + $0xd0] sm:$0xff]
    %v189 = vld [vmem:[#allocation5 + $0xd8] sm:$0xff]
    %v190 = vld [vmem:[#allocation5 + $0xe0] sm:$0xff]
    %v191 = vld [vmem:[#allocation5 + $0xe8] sm:$0xff]
    %v192 = vld [vmem:[#allocation5 + $0xf0] sm:$0xff]
    %v193 = vld [vmem:[#allocation5 + $0xf8] sm:$0xff]
    %v194 = vld [vmem:[#allocation5 + $0x100] sm:$0xff]
    %v195 = vld [vmem:[#allocation5 + $0x108] sm:$0xff]
    %v196 = vld [vmem:[#allocation5 + $0x110] sm:$0xff]
    %v197 = vld [vmem:[#allocation5 + $0x118] sm:$0xff]
    %v198 = vld [vmem:[#allocation5 + $0x120] sm:$0xff]
    %v199 = vld [vmem:[#allocation5 + $0x128] sm:$0xff]
    %v200 = vld [vmem:[#allocation5 + $0x130] sm:$0xff]
    %v201 = vld [vmem:[#allocation5 + $0x138] sm:$0xff]
    %v202 = vld [vmem:[#allocation5 + $0x140] sm:$0xff]
    %v203 = vld [vmem:[#allocation5 + $0x148] sm:$0xff]
    %v204 = vld [vmem:[#allocation5 + $0x150] sm:$0xff]
    %v205 = vld [vmem:[#allocation5 + $0x158] sm:$0xff]
    %v206 = vld [vmem:[#allocation5 + $0x160] sm:$0xff]
    %v207 = vld [vmem:[#allocation5 + $0x168] sm:$0xff]
    %v208 = vld [vmem:[#allocation5 + $0x170] sm:$0xff]
    %v209 = vld [vmem:[#allocation5 + $0x178] sm:$0xff]
    %v210 = vld [vmem:[#allocation5 + $0x180] sm:$0xff]
    %v211 = vld [vmem:[#allocation5 + $0x188] sm:$0xff]
    %v212 = vld [vmem:[#allocation5 + $0x190] sm:$0xff]
    %v213 = vld [vmem:[#allocation5 + $0x198] sm:$0xff]
    %v214 = vld [vmem:[#allocation5 + $0x1a0] sm:$0xff]
    %v215 = vld [vmem:[#allocation5 + $0x1a8] sm:$0xff]
    %v216 = vld [vmem:[#allocation5 + $0x1b0] sm:$0xff]
    %v217 = vld [vmem:[#allocation5 + $0x1b8] sm:$0xff]
    %v218 = vld [vmem:[#allocation5 + $0x1c0] sm:$0xff]
    %v219 = vld [vmem:[#allocation5 + $0x1c8] sm:$0xff]
    %v220 = vld [vmem:[#allocation5 + $0x1d0] sm:$0xff]
    %v221 = vld [vmem:[#allocation5 + $0x1d8] sm:$0xff]
    %v222 = vld [vmem:[#allocation5 + $0x1e0] sm:$0xff]
    %v223 = vld [vmem:[#allocation5 + $0x1e8] sm:$0xff]
    %v224 = vld [vmem:[#allocation5 + $0x1f0] sm:$0xff]
    %v225 = vld [vmem:[#allocation5 + $0x1f8] sm:$0xff]
    %226 = vmatprep.subr.mxu0 %v163
    %227 = vmatpush1.msra.mxu0 %v162
    %228 = vmatprep.subr.mxu0 %v165
    %229 = vmatpush1.msra.mxu0 %v164
    %230 = vmatprep.subr.mxu0 %v167
    %231 = vmatpush1.msra.mxu0 %v166
    %232 = vmatprep.subr.mxu0 %v169
    %233 = vmatpush1.msra.mxu0 %v168
    %234 = vmatprep.subr.mxu0 %v171
    %235 = vmatpush1.msra.mxu0 %v170
    %236 = vmatprep.subr.mxu0 %v173
    %237 = vmatpush1.msra.mxu0 %v172
    %238 = vmatprep.subr.mxu0 %v175
    %239 = vmatpush1.msra.mxu0 %v174
    %240 = vmatprep.subr.mxu0 %v177
    %241 = vmatpush1.msra.mxu0 %v176
    %242 = vmatprep.subr.mxu0 %v179
    %243 = vmatpush1.msra.mxu0 %v178
    %244 = vmatprep.subr.mxu0 %v181
    %245 = vmatpush1.msra.mxu0 %v180
    %246 = vmatprep.subr.mxu0 %v183
    %247 = vmatpush1.msra.mxu0 %v182
    %248 = vmatprep.subr.mxu0 %v185
    %249 = vmatpush1.msra.mxu0 %v184
    %250 = vmatprep.subr.mxu0 %v187
    %251 = vmatpush1.msra.mxu0 %v186
    %252 = vmatprep.subr.mxu0 %v189
    %253 = vmatpush1.msra.mxu0 %v188
    %254 = vmatprep.subr.mxu0 %v191
    %255 = vmatpush1.msra.mxu0 %v190
    %256 = vmatprep.subr.mxu0 %v193
    %257 = vmatpush1.msra.mxu0 %v192
    %258 = vmatprep.subr.mxu0 %v195
    %259 = vmatpush1.msra.mxu0 %v194
    %260 = vmatprep.subr.mxu0 %v197
    %261 = vmatpush1.msra.mxu0 %v196
    %262 = vmatprep.subr.mxu0 %v199
    %263 = vmatpush1.msra.mxu0 %v198
    %264 = vmatprep.subr.mxu0 %v201
    %265 = vmatpush1.msra.mxu0 %v200
    %266 = vmatprep.subr.mxu0 %v203
    %267 = vmatpush1.msra.mxu0 %v202
    %268 = vmatprep.subr.mxu0 %v205
    %269 = vmatpush1.msra.mxu0 %v204
    %270 = vmatprep.subr.mxu0 %v207
    %271 = vmatpush1.msra.mxu0 %v206
    %272 = vmatprep.subr.mxu0 %v209
    %273 = vmatpush1.msra.mxu0 %v208
    %274 = vmatprep.subr.mxu0 %v211
    %275 = vmatpush1.msra.mxu0 %v210
    %276 = vmatprep.subr.mxu0 %v213
    %277 = vmatpush1.msra.mxu0 %v212
    %278 = vmatprep.subr.mxu0 %v215
    %279 = vmatpush1.msra.mxu0 %v214
    %280 = vmatprep.subr.mxu0 %v217
    %281 = vmatpush1.msra.mxu0 %v216
    %282 = vmatprep.subr.mxu0 %v219
    %283 = vmatpush1.msra.mxu0 %v218
    %284 = vmatprep.subr.mxu0 %v221
    %285 = vmatpush1.msra.mxu0 %v220
    %286 = vmatprep.subr.mxu0 %v223
    %287 = vmatpush1.msra.mxu0 %v222
    %288 = vmatprep.subr.mxu0 %v225
    %289 = vmatpush1.msra.mxu0 %v224
    %290 = vmatprep.mubr.f32.mxu0 %v87
    %291 = vmatmul.mubr.f32.gmra.mrb[0].mxu0 %v86
    %v292 = vpop.f32.mrb[0].mxu0
    %v293 = vadd.f32 0.0, %v292
    %v294 = vpop.f32.mrb[0].mxu0
    %v295 = vadd.f32 0.0, %v294
    %296 = vmatprep.mubr.f32.mxu0 %v89
    %297 = vmatmul.mubr.f32.gmra.mrb[0].mxu0 %v88
    %v298 = vpop.f32.mrb[0].mxu0
    %v299 = vadd.f32 0.0, %v298
    %v300 = vpop.f32.mrb[0].mxu0
    %v301 = vadd.f32 0.0, %v300
    %302 = vmatprep.mubr.f32.mxu0 %v91
    %303 = vmatmul.mubr.f32.gmra.mrb[0].mxu0 %v90
    %v304 = vpop.f32.mrb[0].mxu0
    %v305 = vadd.f32 0.0, %v304
    %v306 = vpop.f32.mrb[0].mxu0
    %v307 = vadd.f32 0.0, %v306
    %308 = vmatprep.mubr.f32.mxu0 %v93
    %309 = vmatmul.mubr.f32.gmra.mrb[0].mxu0 %v92
    %v310 = vpop.f32.mrb[0].mxu0
    %v311 = vadd.f32 0.0, %v310
    %v312 = vpop.f32.mrb[0].mxu0
    %v313 = vadd.f32 0.0, %v312
    %314 = vmatprep.mubr.f32.mxu0 %v95
    %315 = vmatmul.mubr.f32.gmra.mrb[0].mxu0 %v94
    %v316 = vpop.f32.mrb[0].mxu0
    %v317 = vadd.f32 0.0, %v316
    %v318 = vpop.f32.mrb[0].mxu0
    %v319 = vadd.f32 0.0, %v318
    %320 = vmatprep.mubr.f32.mxu0 %v97
    %321 = vmatmul.mubr.f32.gmra.mrb[0].mxu0 %v96
    %v322 = vpop.f32.mrb[0].mxu0
    %v323 = vadd.f32 0.0, %v322
    %v324 = vpop.f32.mrb[0].mxu0
    %v325 = vadd.f32 0.0, %v324
    %326 = vmatprep.mubr.f32.mxu0 %v99
    %327 = vmatmul.mubr.f32.gmra.mrb[0].mxu0 %v98
    %v328 = vpop.f32.mrb[0].mxu0
    %v329 = vadd.f32 0.0, %v328
    %v330 = vpop.f32.mrb[0].mxu0
    %v331 = vadd.f32 0.0, %v330
    %332 = vmatprep.mubr.f32.mxu0 %v101
    %333 = vmatmul.mubr.f32.gmra.mrb[0].mxu0 %v100
    %v334 = vpop.f32.mrb[0].mxu0
    %v335 = vadd.f32 0.0, %v334
    %v336 = vpop.f32.mrb[0].mxu0
    %v337 = vadd.f32 0.0, %v336
    %338 = vmatprep.mubr.f32.mxu0 %v103
    %339 = vmatmul.mubr.f32.gmra.mrb[0].mxu0 %v102
    %v340 = vpop.f32.mrb[0].mxu0
    %v341 = vadd.f32 0.0, %v340
    %v342 = vpop.f32.mrb[0].mxu0
    %v343 = vadd.f32 0.0, %v342
    %344 = vmatprep.mubr.f32.mxu0 %v105
    %345 = vmatmul.mubr.f32.gmra.mrb[0].mxu0 %v104
    %v346 = vpop.f32.mrb[0].mxu0
    %v347 = vadd.f32 0.0, %v346
    %v348 = vpop.f32.mrb[0].mxu0
    %v349 = vadd.f32 0.0, %v348
    %350 = vmatprep.mubr.f32.mxu0 %v107
    %351 = vmatmul.mubr.f32.gmra.mrb[0].mxu0 %v106
    %v352 = vpop.f32.mrb[0].mxu0
    %v353 = vadd.f32 0.0, %v352
    %v354 = vpop.f32.mrb[0].mxu0
    %v355 = vadd.f32 0.0, %v354
    %356 = vmatprep.mubr.f32.mxu0 %v109
    %357 = vmatmul.mubr.f32.gmra.mrb[0].mxu0 %v108
    %v358 = vpop.f32.mrb[0].mxu0
    %v359 = vadd.f32 0.0, %v358
    %v360 = vpop.f32.mrb[0].mxu0
    %v361 = vadd.f32 0.0, %v360
    %362 = vmatprep.mubr.f32.mxu0 %v111
    %363 = vmatmul.mubr.f32.gmra.mrb[0].mxu0 %v110
    %v364 = vpop.f32.mrb[0].mxu0
    %v365 = vadd.f32 0.0, %v364
    %v366 = vpop.f32.mrb[0].mxu0
    %v367 = vadd.f32 0.0, %v366
    %368 = vmatprep.mubr.f32.mxu0 %v113
    %369 = vmatmul.mubr.f32.gmra.mrb[0].mxu0 %v112
    %v370 = vpop.f32.mrb[0].mxu0
    %v371 = vadd.f32 0.0, %v370
    %v372 = vpop.f32.mrb[0].mxu0
    %v373 = vadd.f32 0.0, %v372
    %374 = vmatprep.mubr.f32.mxu0 %v115
    %375 = vmatmul.mubr.f32.gmra.mrb[0].mxu0 %v114
    %v376 = vpop.f32.mrb[0].mxu0
    %v377 = vadd.f32 0.0, %v376
    %v378 = vpop.f32.mrb[0].mxu0
    %v379 = vadd.f32 0.0, %v378
    %380 = vmatprep.mubr.f32.mxu0 %v117
    %381 = vmatmul.mubr.f32.gmra.mrb[0].mxu0 %v116
    %v382 = vpop.f32.mrb[0].mxu0
    %v383 = vadd.f32 0.0, %v382
    %v384 = vpop.f32.mrb[0].mxu0
    %v385 = vadd.f32 0.0, %v384
    %386 = vmatprep.mubr.f32.mxu0 %v119
    %387 = vmatmul.mubr.f32.gmra.mrb[0].mxu0 %v118
    %v388 = vpop.f32.mrb[0].mxu0
    %v389 = vadd.f32 0.0, %v388
    %v390 = vpop.f32.mrb[0].mxu0
    %v391 = vadd.f32 0.0, %v390
    %392 = vmatprep.mubr.f32.mxu0 %v121
    %393 = vmatmul.mubr.f32.gmra.mrb[0].mxu0 %v120
    %v394 = vpop.f32.mrb[0].mxu0
    %v395 = vadd.f32 0.0, %v394
    %v396 = vpop.f32.mrb[0].mxu0
    %v397 = vadd.f32 0.0, %v396
    %398 = vmatprep.mubr.f32.mxu0 %v123
    %399 = vmatmul.mubr.f32.gmra.mrb[0].mxu0 %v122
    %v400 = vpop.f32.mrb[0].mxu0
    %v401 = vadd.f32 0.0, %v400
    %v402 = vpop.f32.mrb[0].mxu0
    %v403 = vadd.f32 0.0, %v402
    %404 = vmatprep.mubr.f32.mxu0 %v125
    %405 = vmatmul.mubr.f32.gmra.mrb[0].mxu0 %v124
    %v406 = vpop.f32.mrb[0].mxu0
    %v407 = vadd.f32 0.0, %v406
    %v408 = vpop.f32.mrb[0].mxu0
    %v409 = vadd.f32 0.0, %v408
    %410 = vmatprep.mubr.f32.mxu0 %v127
    %411 = vmatmul.mubr.f32.gmra.mrb[0].mxu0 %v126
    %v412 = vpop.f32.mrb[0].mxu0
    %v413 = vadd.f32 0.0, %v412
    %v414 = vpop.f32.mrb[0].mxu0
    %v415 = vadd.f32 0.0, %v414
    %416 = vmatprep.mubr.f32.mxu0 %v129
    %417 = vmatmul.mubr.f32.gmra.mrb[0].mxu0 %v128
    %v418 = vpop.f32.mrb[0].mxu0
    %v419 = vadd.f32 0.0, %v418
    %v420 = vpop.f32.mrb[0].mxu0
    %v421 = vadd.f32 0.0, %v420
    %422 = vmatprep.mubr.f32.mxu0 %v131
    %423 = vmatmul.mubr.f32.gmra.mrb[0].mxu0 %v130
    %v424 = vpop.f32.mrb[0].mxu0
    %v425 = vadd.f32 0.0, %v424
    %v426 = vpop.f32.mrb[0].mxu0
    %v427 = vadd.f32 0.0, %v426
    %428 = vmatprep.mubr.f32.mxu0 %v133
    %429 = vmatmul.mubr.f32.gmra.mrb[0].mxu0 %v132
    %v430 = vpop.f32.mrb[0].mxu0
    %v431 = vadd.f32 0.0, %v430
    %v432 = vpop.f32.mrb[0].mxu0
    %v433 = vadd.f32 0.0, %v432
    %434 = vmatprep.mubr.f32.mxu0 %v135
    %435 = vmatmul.mubr.f32.gmra.mrb[0].mxu0 %v134
    %v436 = vpop.f32.mrb[0].mxu0
    %v437 = vadd.f32 0.0, %v436
    %v438 = vpop.f32.mrb[0].mxu0
    %v439 = vadd.f32 0.0, %v438
    %440 = vmatprep.mubr.f32.mxu0 %v137
    %441 = vmatmul.mubr.f32.gmra.mrb[0].mxu0 %v136
    %v442 = vpop.f32.mrb[0].mxu0
    %v443 = vadd.f32 0.0, %v442
    %v444 = vpop.f32.mrb[0].mxu0
    %v445 = vadd.f32 0.0, %v444
    %446 = vmatprep.mubr.f32.mxu0 %v139
    %447 = vmatmul.mubr.f32.gmra.mrb[0].mxu0 %v138
    %v448 = vpop.f32.mrb[0].mxu0
    %v449 = vadd.f32 0.0, %v448
    %v450 = vpop.f32.mrb[0].mxu0
    %v451 = vadd.f32 0.0, %v450
    %452 = vmatprep.mubr.f32.mxu0 %v141
    %453 = vmatmul.mubr.f32.gmra.mrb[0].mxu0 %v140
    %v454 = vpop.f32.mrb[0].mxu0
    %v455 = vadd.f32 0.0, %v454
    %v456 = vpop.f32.mrb[0].mxu0
    %v457 = vadd.f32 0.0, %v456
    %458 = vmatprep.mubr.f32.mxu0 %v143
    %459 = vmatmul.mubr.f32.gmra.mrb[0].mxu0 %v142
    %v460 = vpop.f32.mrb[0].mxu0
    %v461 = vadd.f32 0.0, %v460
    %v462 = vpop.f32.mrb[0].mxu0
    %v463 = vadd.f32 0.0, %v462
    %464 = vmatprep.mubr.f32.mxu0 %v145
    %465 = vmatmul.mubr.f32.gmra.mrb[0].mxu0 %v144
    %v466 = vpop.f32.mrb[0].mxu0
    %v467 = vadd.f32 0.0, %v466
    %v468 = vpop.f32.mrb[0].mxu0
    %v469 = vadd.f32 0.0, %v468
    %470 = vmatprep.mubr.f32.mxu0 %v147
    %471 = vmatmul.mubr.f32.gmra.mrb[0].mxu0 %v146
    %v472 = vpop.f32.mrb[0].mxu0
    %v473 = vadd.f32 0.0, %v472
    %v474 = vpop.f32.mrb[0].mxu0
    %v475 = vadd.f32 0.0, %v474
    %476 = vmatprep.mubr.f32.mxu0 %v149
    %477 = vmatmul.mubr.f32.gmra.mrb[0].mxu0 %v148
    %v478 = vpop.f32.mrb[0].mxu0
    %v479 = vadd.f32 0.0, %v478
    %v480 = vpop.f32.mrb[0].mxu0
    %v481 = vadd.f32 0.0, %v480
    %482 = vmatprep.mubr.f32.mxu0 %v151
    %483 = vmatmul.mubr.f32.gmra.mrb[0].mxu0 %v150
    %v484 = vpop.f32.mrb[0].mxu0
    %v485 = vadd.f32 0.0, %v484
    %v486 = vpop.f32.mrb[0].mxu0
    %v487 = vadd.f32 0.0, %v486
    %488 = vmatprep.mubr.f32.mxu0 %v153
    %489 = vmatmul.mubr.f32.gmra.mrb[0].mxu0 %v152
    %v490 = vpop.f32.mrb[0].mxu0
    %v491 = vadd.f32 0.0, %v490
    %v492 = vpop.f32.mrb[0].mxu0
    %v493 = vadd.f32 0.0, %v492
    %494 = vmatprep.mubr.f32.mxu0 %v155
    %495 = vmatmul.mubr.f32.gmra.mrb[0].mxu0 %v154
    %v496 = vpop.f32.mrb[0].mxu0
    %v497 = vadd.f32 0.0, %v496
    %v498 = vpop.f32.mrb[0].mxu0
    %v499 = vadd.f32 0.0, %v498
    %500 = vmatprep.mubr.f32.mxu0 %v157
    %501 = vmatmul.mubr.f32.gmra.mrb[0].mxu0 %v156
    %v502 = vpop.f32.mrb[0].mxu0
    %v503 = vadd.f32 0.0, %v502
    %v504 = vpop.f32.mrb[0].mxu0
    %v505 = vadd.f32 0.0, %v504
    %506 = vmatprep.mubr.f32.mxu0 %v159
    %507 = vmatmul.mubr.f32.gmra.mrb[0].mxu0 %v158
    %v508 = vpop.f32.mrb[0].mxu0
    %v509 = vadd.f32 0.0, %v508
    %v510 = vpop.f32.mrb[0].mxu0
    %v511 = vadd.f32 0.0, %v510
    %512 = vmatprep.mubr.f32.mxu0 %v161
    %513 = vmatmul.mubr.f32.gmra.mrb[0].mxu0 %v160
    %v514 = vpop.f32.mrb[0].mxu0
    %v515 = vadd.f32 0.0, %v514
    %v516 = vpop.f32.mrb[0].mxu0
    %v517 = vadd.f32 0.0, %v516
    %518 = vdwg.mxu0
    %v519 = vsub.f32 %v86, %v293
    %v520 = vsub.f32 %v87, %v295
    %v521 = vsub.f32 %v88, %v299
    %v522 = vsub.f32 %v89, %v301
    %v523 = vsub.f32 %v90, %v305
    %v524 = vsub.f32 %v91, %v307
    %v525 = vsub.f32 %v92, %v311
    %v526 = vsub.f32 %v93, %v313
    %v527 = vsub.f32 %v94, %v317
    %v528 = vsub.f32 %v95, %v319
    %v529 = vsub.f32 %v96, %v323
    %v530 = vsub.f32 %v97, %v325
    %v531 = vsub.f32 %v98, %v329
    %v532 = vsub.f32 %v99, %v331
    %v533 = vsub.f32 %v100, %v335
    %v534 = vsub.f32 %v101, %v337
    %v535 = vsub.f32 %v102, %v341
    %v536 = vsub.f32 %v103, %v343
    %v537 = vsub.f32 %v104, %v347
    %v538 = vsub.f32 %v105, %v349
    %v539 = vsub.f32 %v106, %v353
    %v540 = vsub.f32 %v107, %v355
    %v541 = vsub.f32 %v108, %v359
    %v542 = vsub.f32 %v109, %v361
    %v543 = vsub.f32 %v110, %v365
    %v544 = vsub.f32 %v111, %v367
    %v545 = vsub.f32 %v112, %v371
    %v546 = vsub.f32 %v113, %v373
    %v547 = vsub.f32 %v114, %v377
    %v548 = vsub.f32 %v115, %v379
    %v549 = vsub.f32 %v116, %v383
    %v550 = vsub.f32 %v117, %v385
    %v551 = vsub.f32 %v118, %v389
    %v552 = vsub.f32 %v119, %v391
    %v553 = vsub.f32 %v120, %v395
    %v554 = vsub.f32 %v121, %v397
    %v555 = vsub.f32 %v122, %v401
    %v556 = vsub.f32 %v123, %v403
    %v557 = vsub.f32 %v124, %v407
    %v558 = vsub.f32 %v125, %v409
    %v559 = vsub.f32 %v126, %v413
    %v560 = vsub.f32 %v127, %v415
    %v561 = vsub.f32 %v128, %v419
    %v562 = vsub.f32 %v129, %v421
    %v563 = vsub.f32 %v130, %v425
    %v564 = vsub.f32 %v131, %v427
    %v565 = vsub.f32 %v132, %v431
    %v566 = vsub.f32 %v133, %v433
    %v567 = vsub.f32 %v134, %v437
    %v568 = vsub.f32 %v135, %v439
    %v569 = vsub.f32 %v136, %v443
    %v570 = vsub.f32 %v137, %v445
    %v571 = vsub.f32 %v138, %v449
    %v572 = vsub.f32 %v139, %v451
    %v573 = vsub.f32 %v140, %v455
    %v574 = vsub.f32 %v141, %v457
    %v575 = vsub.f32 %v142, %v461
    %v576 = vsub.f32 %v143, %v463
    %v577 = vsub.f32 %v144, %v467
    %v578 = vsub.f32 %v145, %v469
    %v579 = vsub.f32 %v146, %v473
    %v580 = vsub.f32 %v147, %v475
    %v581 = vsub.f32 %v148, %v479
    %v582 = vsub.f32 %v149, %v481
    %v583 = vsub.f32 %v150, %v485
    %v584 = vsub.f32 %v151, %v487
    %v585 = vsub.f32 %v152, %v491
    %v586 = vsub.f32 %v153, %v493
    %v587 = vsub.f32 %v154, %v497
    %v588 = vsub.f32 %v155, %v499
    %v589 = vsub.f32 %v156, %v503
    %v590 = vsub.f32 %v157, %v505
    %v591 = vsub.f32 %v158, %v509
    %v592 = vsub.f32 %v159, %v511
    %v593 = vsub.f32 %v160, %v515
    %v594 = vsub.f32 %v161, %v517
    %v595 = vmul.f32 %v519, %v519
    %v596 = vmul.f32 %v520, %v520
    %v597 = vmul.f32 %v521, %v521
    %v598 = vmul.f32 %v522, %v522
    %v599 = vmul.f32 %v523, %v523
    %v600 = vmul.f32 %v524, %v524
    %v601 = vmul.f32 %v525, %v525
    %v602 = vmul.f32 %v526, %v526
    %v603 = vmul.f32 %v527, %v527
    %v604 = vmul.f32 %v528, %v528
    %v605 = vmul.f32 %v529, %v529
    %v606 = vmul.f32 %v530, %v530
    %v607 = vmul.f32 %v531, %v531
    %v608 = vmul.f32 %v532, %v532
    %v609 = vmul.f32 %v533, %v533
    %v610 = vmul.f32 %v534, %v534
    %v611 = vmul.f32 %v535, %v535
    %v612 = vmul.f32 %v536, %v536
    %v613 = vmul.f32 %v537, %v537
    %v614 = vmul.f32 %v538, %v538
    %v615 = vmul.f32 %v539, %v539
    %v616 = vmul.f32 %v540, %v540
    %v617 = vmul.f32 %v541, %v541
    %v618 = vmul.f32 %v542, %v542
    %v619 = vmul.f32 %v543, %v543
    %v620 = vmul.f32 %v544, %v544
    %v621 = vmul.f32 %v545, %v545
    %v622 = vmul.f32 %v546, %v546
    %v623 = vmul.f32 %v547, %v547
    %v624 = vmul.f32 %v548, %v548
    %v625 = vmul.f32 %v549, %v549
    %v626 = vmul.f32 %v550, %v550
    %v627 = vmul.f32 %v551, %v551
    %v628 = vmul.f32 %v552, %v552
    %v629 = vmul.f32 %v553, %v553
    %v630 = vmul.f32 %v554, %v554
    %v631 = vmul.f32 %v555, %v555
    %v632 = vmul.f32 %v556, %v556
    %v633 = vmul.f32 %v557, %v557
    %v634 = vmul.f32 %v558, %v558
    %v635 = vmul.f32 %v559, %v559
    %v636 = vmul.f32 %v560, %v560
    %v637 = vmul.f32 %v561, %v561
    %v638 = vmul.f32 %v562, %v562
    %v639 = vmul.f32 %v563, %v563
    %v640 = vmul.f32 %v564, %v564
    %v641 = vmul.f32 %v565, %v565
    %v642 = vmul.f32 %v566, %v566
    %v643 = vmul.f32 %v567, %v567
    %v644 = vmul.f32 %v568, %v568
    %v645 = vmul.f32 %v569, %v569
    %v646 = vmul.f32 %v570, %v570
    %v647 = vmul.f32 %v571, %v571
    %v648 = vmul.f32 %v572, %v572
    %v649 = vmul.f32 %v573, %v573
    %v650 = vmul.f32 %v574, %v574
    %v651 = vmul.f32 %v575, %v575
    %v652 = vmul.f32 %v576, %v576
    %v653 = vmul.f32 %v577, %v577
    %v654 = vmul.f32 %v578, %v578
    %v655 = vmul.f32 %v579, %v579
    %v656 = vmul.f32 %v580, %v580
    %v657 = vmul.f32 %v581, %v581
    %v658 = vmul.f32 %v582, %v582
    %v659 = vmul.f32 %v583, %v583
    %v660 = vmul.f32 %v584, %v584
    %v661 = vmul.f32 %v585, %v585
    %v662 = vmul.f32 %v586, %v586
    %v663 = vmul.f32 %v587, %v587
    %v664 = vmul.f32 %v588, %v588
    %v665 = vmul.f32 %v589, %v589
    %v666 = vmul.f32 %v590, %v590
    %v667 = vmul.f32 %v591, %v591
    %v668 = vmul.f32 %v592, %v592
    %v669 = vmul.f32 %v593, %v593
    %v670 = vmul.f32 %v594, %v594
    %671 = vmatprep.subr.mxu0 %v163
    %672 = vmatpush1.msra.mxu0 %v162
    %673 = vmatprep.subr.mxu0 %v165
    %674 = vmatpush1.msra.mxu0 %v164
    %675 = vmatprep.subr.mxu0 %v167
    %676 = vmatpush1.msra.mxu0 %v166
    %677 = vmatprep.subr.mxu0 %v169
    %678 = vmatpush1.msra.mxu0 %v168
    %679 = vmatprep.subr.mxu0 %v171
    %680 = vmatpush1.msra.mxu0 %v170
    %681 = vmatprep.subr.mxu0 %v173
    %682 = vmatpush1.msra.mxu0 %v172
    %683 = vmatprep.subr.mxu0 %v175
    %684 = vmatpush1.msra.mxu0 %v174
    %685 = vmatprep.subr.mxu0 %v177
    %686 = vmatpush1.msra.mxu0 %v176
    %687 = vmatprep.subr.mxu0 %v179
    %688 = vmatpush1.msra.mxu0 %v178
    %689 = vmatprep.subr.mxu0 %v181
    %690 = vmatpush1.msra.mxu0 %v180
    %691 = vmatprep.subr.mxu0 %v183
    %692 = vmatpush1.msra.mxu0 %v182
    %693 = vmatprep.subr.mxu0 %v185
    %694 = vmatpush1.msra.mxu0 %v184
    %695 = vmatprep.subr.mxu0 %v187
    %696 = vmatpush1.msra.mxu0 %v186
    %697 = vmatprep.subr.mxu0 %v189
    %698 = vmatpush1.msra.mxu0 %v188
    %699 = vmatprep.subr.mxu0 %v191
    %700 = vmatpush1.msra.mxu0 %v190
    %701 = vmatprep.subr.mxu0 %v193
    %702 = vmatpush1.msra.mxu0 %v192
    %703 = vmatprep.subr.mxu0 %v195
    %704 = vmatpush1.msra.mxu0 %v194
    %705 = vmatprep.subr.mxu0 %v197
    %706 = vmatpush1.msra.mxu0 %v196
    %707 = vmatprep.subr.mxu0 %v199
    %708 = vmatpush1.msra.mxu0 %v198
    %709 = vmatprep.subr.mxu0 %v201
    %710 = vmatpush1.msra.mxu0 %v200
    %711 = vmatprep.subr.mxu0 %v203
    %712 = vmatpush1.msra.mxu0 %v202
    %713 = vmatprep.subr.mxu0 %v205
    %714 = vmatpush1.msra.mxu0 %v204
    %715 = vmatprep.subr.mxu0 %v207
    %716 = vmatpush1.msra.mxu0 %v206
    %717 = vmatprep.subr.mxu0 %v209
    %718 = vmatpush1.msra.mxu0 %v208
    %719 = vmatprep.subr.mxu0 %v211
    %720 = vmatpush1.msra.mxu0 %v210
    %721 = vmatprep.subr.mxu0 %v213
    %722 = vmatpush1.msra.mxu0 %v212
    %723 = vmatprep.subr.mxu0 %v215
    %724 = vmatpush1.msra.mxu0 %v214
    %725 = vmatprep.subr.mxu0 %v217
    %726 = vmatpush1.msra.mxu0 %v216
    %727 = vmatprep.subr.mxu0 %v219
    %728 = vmatpush1.msra.mxu0 %v218
    %729 = vmatprep.subr.mxu0 %v221
    %730 = vmatpush1.msra.mxu0 %v220
    %731 = vmatprep.subr.mxu0 %v223
    %732 = vmatpush1.msra.mxu0 %v222
    %733 = vmatprep.subr.mxu0 %v225
    %734 = vmatpush1.msra.mxu0 %v224
    %735 = vmatprep.mubr.f32.mxu0 %v596
    %736 = vmatmul.mubr.f32.gmra.mrb[0].mxu0 %v595
    %v737 = vpop.f32.mrb[0].mxu0
    %v738 = vadd.f32 1e-05, %v737
    %v739 = vpop.f32.mrb[0].mxu0
    %v740 = vadd.f32 1e-05, %v739
    %741 = vmatprep.mubr.f32.mxu0 %v598
    %742 = vmatmul.mubr.f32.gmra.mrb[0].mxu0 %v597
    %v743 = vpop.f32.mrb[0].mxu0
    %v744 = vadd.f32 1e-05, %v743
    %v745 = vpop.f32.mrb[0].mxu0
    %v746 = vadd.f32 1e-05, %v745
    %747 = vmatprep.mubr.f32.mxu0 %v600
    %748 = vmatmul.mubr.f32.gmra.mrb[0].mxu0 %v599
    %v749 = vpop.f32.mrb[0].mxu0
    %v750 = vadd.f32 1e-05, %v749
    %v751 = vpop.f32.mrb[0].mxu0
    %v752 = vadd.f32 1e-05, %v751
    %753 = vmatprep.mubr.f32.mxu0 %v602
    %754 = vmatmul.mubr.f32.gmra.mrb[0].mxu0 %v601
    %v755 = vpop.f32.mrb[0].mxu0
    %v756 = vadd.f32 1e-05, %v755
    %v757 = vpop.f32.mrb[0].mxu0
    %v758 = vadd.f32 1e-05, %v757
    %759 = vmatprep.mubr.f32.mxu0 %v604
    %760 = vmatmul.mubr.f32.gmra.mrb[0].mxu0 %v603
    %v761 = vpop.f32.mrb[0].mxu0
    %v762 = vadd.f32 1e-05, %v761
    %v763 = vpop.f32.mrb[0].mxu0
    %v764 = vadd.f32 1e-05, %v763
    %765 = vmatprep.mubr.f32.mxu0 %v606
    %766 = vmatmul.mubr.f32.gmra.mrb[0].mxu0 %v605
    %v767 = vpop.f32.mrb[0].mxu0
    %v768 = vadd.f32 1e-05, %v767
    %v769 = vpop.f32.mrb[0].mxu0
    %v770 = vadd.f32 1e-05, %v769
    %771 = vmatprep.mubr.f32.mxu0 %v608
    %772 = vmatmul.mubr.f32.gmra.mrb[0].mxu0 %v607
    %v773 = vpop.f32.mrb[0].mxu0
    %v774 = vadd.f32 1e-05, %v773
    %v775 = vpop.f32.mrb[0].mxu0
    %v776 = vadd.f32 1e-05, %v775
    %777 = vmatprep.mubr.f32.mxu0 %v610
    %778 = vmatmul.mubr.f32.gmra.mrb[0].mxu0 %v609
    %v779 = vpop.f32.mrb[0].mxu0
    %v780 = vadd.f32 1e-05, %v779
    %v781 = vpop.f32.mrb[0].mxu0
    %v782 = vadd.f32 1e-05, %v781
    %783 = vmatprep.mubr.f32.mxu0 %v612
    %784 = vmatmul.mubr.f32.gmra.mrb[0].mxu0 %v611
    %v785 = vpop.f32.mrb[0].mxu0
    %v786 = vadd.f32 1e-05, %v785
    %v787 = vpop.f32.mrb[0].mxu0
    %v788 = vadd.f32 1e-05, %v787
    %789 = vmatprep.mubr.f32.mxu0 %v614
    %790 = vmatmul.mubr.f32.gmra.mrb[0].mxu0 %v613
    %v791 = vpop.f32.mrb[0].mxu0
    %v792 = vadd.f32 1e-05, %v791
    %v793 = vpop.f32.mrb[0].mxu0
    %v794 = vadd.f32 1e-05, %v793
    %795 = vmatprep.mubr.f32.mxu0 %v616
    %796 = vmatmul.mubr.f32.gmra.mrb[0].mxu0 %v615
    %v797 = vpop.f32.mrb[0].mxu0
    %v798 = vadd.f32 1e-05, %v797
    %v799 = vpop.f32.mrb[0].mxu0
    %v800 = vadd.f32 1e-05, %v799
    %801 = vmatprep.mubr.f32.mxu0 %v618
    %802 = vmatmul.mubr.f32.gmra.mrb[0].mxu0 %v617
    %v803 = vpop.f32.mrb[0].mxu0
    %v804 = vadd.f32 1e-05, %v803
    %v805 = vpop.f32.mrb[0].mxu0
    %v806 = vadd.f32 1e-05, %v805
    %807 = vmatprep.mubr.f32.mxu0 %v620
    %808 = vmatmul.mubr.f32.gmra.mrb[0].mxu0 %v619
    %v809 = vpop.f32.mrb[0].mxu0
    %v810 = vadd.f32 1e-05, %v809
    %v811 = vpop.f32.mrb[0].mxu0
    %v812 = vadd.f32 1e-05, %v811
    %813 = vmatprep.mubr.f32.mxu0 %v622
    %814 = vmatmul.mubr.f32.gmra.mrb[0].mxu0 %v621
    %v815 = vpop.f32.mrb[0].mxu0
    %v816 = vadd.f32 1e-05, %v815
    %v817 = vpop.f32.mrb[0].mxu0
    %v818 = vadd.f32 1e-05, %v817
    %819 = vmatprep.mubr.f32.mxu0 %v624
    %820 = vmatmul.mubr.f32.gmra.mrb[0].mxu0 %v623
    %v821 = vpop.f32.mrb[0].mxu0
    %v822 = vadd.f32 1e-05, %v821
    %v823 = vpop.f32.mrb[0].mxu0
    %v824 = vadd.f32 1e-05, %v823
    %825 = vmatprep.mubr.f32.mxu0 %v626
    %826 = vmatmul.mubr.f32.gmra.mrb[0].mxu0 %v625
    %v827 = vpop.f32.mrb[0].mxu0
    %v828 = vadd.f32 1e-05, %v827
    %v829 = vpop.f32.mrb[0].mxu0
    %v830 = vadd.f32 1e-05, %v829
    %831 = vmatprep.mubr.f32.mxu0 %v628
    %832 = vmatmul.mubr.f32.gmra.mrb[0].mxu0 %v627
    %v833 = vpop.f32.mrb[0].mxu0
    %v834 = vadd.f32 1e-05, %v833
    %v835 = vpop.f32.mrb[0].mxu0
    %v836 = vadd.f32 1e-05, %v835
    %837 = vmatprep.mubr.f32.mxu0 %v630
    %838 = vmatmul.mubr.f32.gmra.mrb[0].mxu0 %v629
    %v839 = vpop.f32.mrb[0].mxu0
    %v840 = vadd.f32 1e-05, %v839
    %v841 = vpop.f32.mrb[0].mxu0
    %v842 = vadd.f32 1e-05, %v841
    %843 = vmatprep.mubr.f32.mxu0 %v632
    %844 = vmatmul.mubr.f32.gmra.mrb[0].mxu0 %v631
    %v845 = vpop.f32.mrb[0].mxu0
    %v846 = vadd.f32 1e-05, %v845
    %v847 = vpop.f32.mrb[0].mxu0
    %v848 = vadd.f32 1e-05, %v847
    %849 = vmatprep.mubr.f32.mxu0 %v634
    %850 = vmatmul.mubr.f32.gmra.mrb[0].mxu0 %v633
    %v851 = vpop.f32.mrb[0].mxu0
    %v852 = vadd.f32 1e-05, %v851
    %v853 = vpop.f32.mrb[0].mxu0
    %v854 = vadd.f32 1e-05, %v853
    %855 = vmatprep.mubr.f32.mxu0 %v636
    %856 = vmatmul.mubr.f32.gmra.mrb[0].mxu0 %v635
    %v857 = vpop.f32.mrb[0].mxu0
    %v858 = vadd.f32 1e-05, %v857
    %v859 = vpop.f32.mrb[0].mxu0
    %v860 = vadd.f32 1e-05, %v859
    %861 = vmatprep.mubr.f32.mxu0 %v638
    %862 = vmatmul.mubr.f32.gmra.mrb[0].mxu0 %v637
    %v863 = vpop.f32.mrb[0].mxu0
    %v864 = vadd.f32 1e-05, %v863
    %v865 = vpop.f32.mrb[0].mxu0
    %v866 = vadd.f32 1e-05, %v865
    %867 = vmatprep.mubr.f32.mxu0 %v640
    %868 = vmatmul.mubr.f32.gmra.mrb[0].mxu0 %v639
    %v869 = vpop.f32.mrb[0].mxu0
    %v870 = vadd.f32 1e-05, %v869
    %v871 = vpop.f32.mrb[0].mxu0
    %v872 = vadd.f32 1e-05, %v871
    %873 = vmatprep.mubr.f32.mxu0 %v642
    %874 = vmatmul.mubr.f32.gmra.mrb[0].mxu0 %v641
    %v875 = vpop.f32.mrb[0].mxu0
    %v876 = vadd.f32 1e-05, %v875
    %v877 = vpop.f32.mrb[0].mxu0
    %v878 = vadd.f32 1e-05, %v877
    %879 = vmatprep.mubr.f32.mxu0 %v644
    %880 = vmatmul.mubr.f32.gmra.mrb[0].mxu0 %v643
    %v881 = vpop.f32.mrb[0].mxu0
    %v882 = vadd.f32 1e-05, %v881
    %v883 = vpop.f32.mrb[0].mxu0
    %v884 = vadd.f32 1e-05, %v883
    %885 = vmatprep.mubr.f32.mxu0 %v646
    %886 = vmatmul.mubr.f32.gmra.mrb[0].mxu0 %v645
    %v887 = vpop.f32.mrb[0].mxu0
    %v888 = vadd.f32 1e-05, %v887
    %v889 = vpop.f32.mrb[0].mxu0
    %v890 = vadd.f32 1e-05, %v889
    %891 = vmatprep.mubr.f32.mxu0 %v648
    %892 = vmatmul.mubr.f32.gmra.mrb[0].mxu0 %v647
    %v893 = vpop.f32.mrb[0].mxu0
    %v894 = vadd.f32 1e-05, %v893
    %v895 = vpop.f32.mrb[0].mxu0
    %v896 = vadd.f32 1e-05, %v895
    %897 = vmatprep.mubr.f32.mxu0 %v650
    %898 = vmatmul.mubr.f32.gmra.mrb[0].mxu0 %v649
    %v899 = vpop.f32.mrb[0].mxu0
    %v900 = vadd.f32 1e-05, %v899
    %v901 = vpop.f32.mrb[0].mxu0
    %v902 = vadd.f32 1e-05, %v901
    %903 = vmatprep.mubr.f32.mxu0 %v652
    %904 = vmatmul.mubr.f32.gmra.mrb[0].mxu0 %v651
    %v905 = vpop.f32.mrb[0].mxu0
    %v906 = vadd.f32 1e-05, %v905
    %v907 = vpop.f32.mrb[0].mxu0
    %v908 = vadd.f32 1e-05, %v907
    %909 = vmatprep.mubr.f32.mxu0 %v654
    %910 = vmatmul.mubr.f32.gmra.mrb[0].mxu0 %v653
    %v911 = vpop.f32.mrb[0].mxu0
    %v912 = vadd.f32 1e-05, %v911
    %v913 = vpop.f32.mrb[0].mxu0
    %v914 = vadd.f32 1e-05, %v913
    %915 = vmatprep.mubr.f32.mxu0 %v656
    %916 = vmatmul.mubr.f32.gmra.mrb[0].mxu0 %v655
    %v917 = vpop.f32.mrb[0].mxu0
    %v918 = vadd.f32 1e-05, %v917
    %v919 = vpop.f32.mrb[0].mxu0
    %v920 = vadd.f32 1e-05, %v919
    %921 = vmatprep.mubr.f32.mxu0 %v658
    %922 = vmatmul.mubr.f32.gmra.mrb[0].mxu0 %v657
    %v923 = vpop.f32.mrb[0].mxu0
    %v924 = vadd.f32 1e-05, %v923
    %v925 = vpop.f32.mrb[0].mxu0
    %v926 = vadd.f32 1e-05, %v925
    %927 = vmatprep.mubr.f32.mxu0 %v660
    %928 = vmatmul.mubr.f32.gmra.mrb[0].mxu0 %v659
    %v929 = vpop.f32.mrb[0].mxu0
    %v930 = vadd.f32 1e-05, %v929
    %v931 = vpop.f32.mrb[0].mxu0
    %v932 = vadd.f32 1e-05, %v931
    %933 = vmatprep.mubr.f32.mxu0 %v662
    %934 = vmatmul.mubr.f32.gmra.mrb[0].mxu0 %v661
    %v935 = vpop.f32.mrb[0].mxu0
    %v936 = vadd.f32 1e-05, %v935
    %v937 = vpop.f32.mrb[0].mxu0
    %v938 = vadd.f32 1e-05, %v937
    %939 = vmatprep.mubr.f32.mxu0 %v664
    %940 = vmatmul.mubr.f32.gmra.mrb[0].mxu0 %v663
    %v941 = vpop.f32.mrb[0].mxu0
    %v942 = vadd.f32 1e-05, %v941
    %v943 = vpop.f32.mrb[0].mxu0
    %v944 = vadd.f32 1e-05, %v943
    %945 = vmatprep.mubr.f32.mxu0 %v666
    %946 = vmatmul.mubr.f32.gmra.mrb[0].mxu0 %v665
    %v947 = vpop.f32.mrb[0].mxu0
    %v948 = vadd.f32 1e-05, %v947
    %v949 = vpop.f32.mrb[0].mxu0
    %v950 = vadd.f32 1e-05, %v949
    %951 = vmatprep.mubr.f32.mxu0 %v668
    %952 = vmatmul.mubr.f32.gmra.mrb[0].mxu0 %v667
    %v953 = vpop.f32.mrb[0].mxu0
    %v954 = vadd.f32 1e-05, %v953
    %v955 = vpop.f32.mrb[0].mxu0
    %v956 = vadd.f32 1e-05, %v955
    %957 = vmatprep.mubr.f32.mxu0 %v670
    %958 = vmatmul.mubr.f32.gmra.mrb[0].mxu0 %v669
    %v959 = vpop.f32.mrb[0].mxu0
    %v960 = vadd.f32 1e-05, %v959
    %v961 = vpop.f32.mrb[0].mxu0
    %v962 = vadd.f32 1e-05, %v961
    %963 = vdwg.mxu0
    %v964 = vrsqrt.pop %v738
    %v965 = vrsqrt.pop %v740
    %v966 = vrsqrt.pop %v744
    %v967 = vrsqrt.pop %v746
    %v968 = vrsqrt.pop %v750
    %v969 = vrsqrt.pop %v752
    %v970 = vrsqrt.pop %v756
    %v971 = vrsqrt.pop %v758
    %v972 = vrsqrt.pop %v762
    %v973 = vrsqrt.pop %v764
    %v974 = vrsqrt.pop %v768
    %v975 = vrsqrt.pop %v770
    %v976 = vrsqrt.pop %v774
    %v977 = vrsqrt.pop %v776
    %v978 = vrsqrt.pop %v780
    %v979 = vrsqrt.pop %v782
    %v980 = vrsqrt.pop %v786
    %v981 = vrsqrt.pop %v788
    %v982 = vrsqrt.pop %v792
    %v983 = vrsqrt.pop %v794
    %v984 = vrsqrt.pop %v798
    %v985 = vrsqrt.pop %v800
    %v986 = vrsqrt.pop %v804
    %v987 = vrsqrt.pop %v806
    %v988 = vrsqrt.pop %v810
    %v989 = vrsqrt.pop %v812
    %v990 = vrsqrt.pop %v816
    %v991 = vrsqrt.pop %v818
    %v992 = vrsqrt.pop %v822
    %v993 = vrsqrt.pop %v824
    %v994 = vrsqrt.pop %v828
    %v995 = vrsqrt.pop %v830
    %v996 = vrsqrt.pop %v834
    %v997 = vrsqrt.pop %v836
    %v998 = vrsqrt.pop %v840
    %v999 = vrsqrt.pop %v842
    %v1000 = vrsqrt.pop %v846
    %v1001 = vrsqrt.pop %v848
    %v1002 = vrsqrt.pop %v852
    %v1003 = vrsqrt.pop %v854
    %v1004 = vrsqrt.pop %v858
    %v1005 = vrsqrt.pop %v860
    %v1006 = vrsqrt.pop %v864
    %v1007 = vrsqrt.pop %v866
    %v1008 = vrsqrt.pop %v870
    %v1009 = vrsqrt.pop %v872
    %v1010 = vrsqrt.pop %v876
    %v1011 = vrsqrt.pop %v878
    %v1012 = vrsqrt.pop %v882
    %v1013 = vrsqrt.pop %v884
    %v1014 = vrsqrt.pop %v888
    %v1015 = vrsqrt.pop %v890
    %v1016 = vrsqrt.pop %v894
    %v1017 = vrsqrt.pop %v896
    %v1018 = vrsqrt.pop %v900
    %v1019 = vrsqrt.pop %v902
    %v1020 = vrsqrt.pop %v906
    %v1021 = vrsqrt.pop %v908
    %v1022 = vrsqrt.pop %v912
    %v1023 = vrsqrt.pop %v914
    %v1024 = vrsqrt.pop %v918
    %v1025 = vrsqrt.pop %v920
    %v1026 = vrsqrt.pop %v924
    %v1027 = vrsqrt.pop %v926
    %v1028 = vrsqrt.pop %v930
    %v1029 = vrsqrt.pop %v932
    %v1030 = vrsqrt.pop %v936
    %v1031 = vrsqrt.pop %v938
    %v1032 = vrsqrt.pop %v942
    %v1033 = vrsqrt.pop %v944
    %v1034 = vrsqrt.pop %v948
    %v1035 = vrsqrt.pop %v950
    %v1036 = vrsqrt.pop %v954
    %v1037 = vrsqrt.pop %v956
    %v1038 = vrsqrt.pop %v960
    %v1039 = vrsqrt.pop %v962
    %v1040 = vmul.f32 %v519, %v964
    %v1041 = vmul.f32 %v520, %v965
    %v1042 = vmul.f32 %v521, %v966
    %v1043 = vmul.f32 %v522, %v967
    %v1044 = vmul.f32 %v523, %v968
    %v1045 = vmul.f32 %v524, %v969
    %v1046 = vmul.f32 %v525, %v970
    %v1047 = vmul.f32 %v526, %v971
    %v1048 = vmul.f32 %v527, %v972
    %v1049 = vmul.f32 %v528, %v973
    %v1050 = vmul.f32 %v529, %v974
    %v1051 = vmul.f32 %v530, %v975
    %v1052 = vmul.f32 %v531, %v976
    %v1053 = vmul.f32 %v532, %v977
    %v1054 = vmul.f32 %v533, %v978
    %v1055 = vmul.f32 %v534, %v979
    %v1056 = vmul.f32 %v535, %v980
    %v1057 = vmul.f32 %v536, %v981
    %v1058 = vmul.f32 %v537, %v982
    %v1059 = vmul.f32 %v538, %v983
    %v1060 = vmul.f32 %v539, %v984
    %v1061 = vmul.f32 %v540, %v985
    %v1062 = vmul.f32 %v541, %v986
    %v1063 = vmul.f32 %v542, %v987
    %v1064 = vmul.f32 %v543, %v988
    %v1065 = vmul.f32 %v544, %v989
    %v1066 = vmul.f32 %v545, %v990
    %v1067 = vmul.f32 %v546, %v991
    %v1068 = vmul.f32 %v547, %v992
    %v1069 = vmul.f32 %v548, %v993
    %v1070 = vmul.f32 %v549, %v994
    %v1071 = vmul.f32 %v550, %v995
    %v1072 = vmul.f32 %v551, %v996
    %v1073 = vmul.f32 %v552, %v997
    %v1074 = vmul.f32 %v553, %v998
    %v1075 = vmul.f32 %v554, %v999
    %v1076 = vmul.f32 %v555, %v1000
    %v1077 = vmul.f32 %v556, %v1001
    %v1078 = vmul.f32 %v557, %v1002
    %v1079 = vmul.f32 %v558, %v1003
    %v1080 = vmul.f32 %v559, %v1004
    %v1081 = vmul.f32 %v560, %v1005
    %v1082 = vmul.f32 %v561, %v1006
    %v1083 = vmul.f32 %v562, %v1007
    %v1084 = vmul.f32 %v563, %v1008
    %v1085 = vmul.f32 %v564, %v1009
    %v1086 = vmul.f32 %v565, %v1010
    %v1087 = vmul.f32 %v566, %v1011
    %v1088 = vmul.f32 %v567, %v1012
    %v1089 = vmul.f32 %v568, %v1013
    %v1090 = vmul.f32 %v569, %v1014
    %v1091 = vmul.f32 %v570, %v1015
    %v1092 = vmul.f32 %v571, %v1016
    %v1093 = vmul.f32 %v572, %v1017
    %v1094 = vmul.f32 %v573, %v1018
    %v1095 = vmul.f32 %v574, %v1019
    %v1096 = vmul.f32 %v575, %v1020
    %v1097 = vmul.f32 %v576, %v1021
    %v1098 = vmul.f32 %v577, %v1022
    %v1099 = vmul.f32 %v578, %v1023
    %v1100 = vmul.f32 %v579, %v1024
    %v1101 = vmul.f32 %v580, %v1025
    %v1102 = vmul.f32 %v581, %v1026
    %v1103 = vmul.f32 %v582, %v1027
    %v1104 = vmul.f32 %v583, %v1028
    %v1105 = vmul.f32 %v584, %v1029
    %v1106 = vmul.f32 %v585, %v1030
    %v1107 = vmul.f32 %v586, %v1031
    %v1108 = vmul.f32 %v587, %v1032
    %v1109 = vmul.f32 %v588, %v1033
    %v1110 = vmul.f32 %v589, %v1034
    %v1111 = vmul.f32 %v590, %v1035
    %v1112 = vmul.f32 %v591, %v1036
    %v1113 = vmul.f32 %v592, %v1037
    %v1114 = vmul.f32 %v593, %v1038
    %v1115 = vmul.f32 %v594, %v1039
    %v1116 = vld [vmem:[%s2] sm:$0x3]
    %v1118 = vlaneseq
    %v1119 = vshrl.u32 %v1118, 7
    %v1120 = vsub.s32 0, %v1119
    %v1121 = vrot.slane %v1116, %v1120
    %v1122 = vlaneseq
    %v1123 = vshrl.u32 %v1122, 7
    %v1124 = vsub.s32 1, %v1123
    %v1125 = vrot.slane %v1116, %v1124
    %v1128 = vmul.f32 %v1040, %v1121
    %v1129 = vmul.f32 %v1041, %v1125
    %v1130 = vmul.f32 %v1042, %v1121
    %v1131 = vmul.f32 %v1043, %v1125
    %v1132 = vmul.f32 %v1044, %v1121
    %v1133 = vmul.f32 %v1045, %v1125
    %v1134 = vmul.f32 %v1046, %v1121
    %v1135 = vmul.f32 %v1047, %v1125
    %v1136 = vmul.f32 %v1048, %v1121
    %v1137 = vmul.f32 %v1049, %v1125
    %v1138 = vmul.f32 %v1050, %v1121
    %v1139 = vmul.f32 %v1051, %v1125
    %v1140 = vmul.f32 %v1052, %v1121
    %v1141 = vmul.f32 %v1053, %v1125
    %v1142 = vmul.f32 %v1054, %v1121
    %v1143 = vmul.f32 %v1055, %v1125
    %v1144 = vmul.f32 %v1056, %v1121
    %v1145 = vmul.f32 %v1057, %v1125
    %v1146 = vmul.f32 %v1058, %v1121
    %v1147 = vmul.f32 %v1059, %v1125
    %v1148 = vmul.f32 %v1060, %v1121
    %v1149 = vmul.f32 %v1061, %v1125
    %v1150 = vmul.f32 %v1062, %v1121
    %v1151 = vmul.f32 %v1063, %v1125
    %v1152 = vmul.f32 %v1064, %v1121
    %v1153 = vmul.f32 %v1065, %v1125
    %v1154 = vmul.f32 %v1066, %v1121
    %v1155 = vmul.f32 %v1067, %v1125
    %v1156 = vmul.f32 %v1068, %v1121
    %v1157 = vmul.f32 %v1069, %v1125
    %v1158 = vmul.f32 %v1070, %v1121
    %v1159 = vmul.f32 %v1071, %v1125
    %v1160 = vmul.f32 %v1072, %v1121
    %v1161 = vmul.f32 %v1073, %v1125
    %v1162 = vmul.f32 %v1074, %v1121
    %v1163 = vmul.f32 %v1075, %v1125
    %v1164 = vmul.f32 %v1076, %v1121
    %v1165 = vmul.f32 %v1077, %v1125
    %v1166 = vmul.f32 %v1078, %v1121
    %v1167 = vmul.f32 %v1079, %v1125
    %v1168 = vmul.f32 %v1080, %v1121
    %v1169 = vmul.f32 %v1081, %v1125
    %v1170 = vmul.f32 %v1082, %v1121
    %v1171 = vmul.f32 %v1083, %v1125
    %v1172 = vmul.f32 %v1084, %v1121
    %v1173 = vmul.f32 %v1085, %v1125
    %v1174 = vmul.f32 %v1086, %v1121
    %v1175 = vmul.f32 %v1087, %v1125
    %v1176 = vmul.f32 %v1088, %v1121
    %v1177 = vmul.f32 %v1089, %v1125
    %v1178 = vmul.f32 %v1090, %v1121
    %v1179 = vmul.f32 %v1091, %v1125
    %v1180 = vmul.f32 %v1092, %v1121
    %v1181 = vmul.f32 %v1093, %v1125
    %v1182 = vmul.f32 %v1094, %v1121
    %v1183 = vmul.f32 %v1095, %v1125
    %v1184 = vmul.f32 %v1096, %v1121
    %v1185 = vmul.f32 %v1097, %v1125
    %v1186 = vmul.f32 %v1098, %v1121
    %v1187 = vmul.f32 %v1099, %v1125
    %v1188 = vmul.f32 %v1100, %v1121
    %v1189 = vmul.f32 %v1101, %v1125
    %v1190 = vmul.f32 %v1102, %v1121
    %v1191 = vmul.f32 %v1103, %v1125
    %v1192 = vmul.f32 %v1104, %v1121
    %v1193 = vmul.f32 %v1105, %v1125
    %v1194 = vmul.f32 %v1106, %v1121
    %v1195 = vmul.f32 %v1107, %v1125
    %v1196 = vmul.f32 %v1108, %v1121
    %v1197 = vmul.f32 %v1109, %v1125
    %v1198 = vmul.f32 %v1110, %v1121
    %v1199 = vmul.f32 %v1111, %v1125
    %v1200 = vmul.f32 %v1112, %v1121
    %v1201 = vmul.f32 %v1113, %v1125
    %v1202 = vmul.f32 %v1114, %v1121
    %v1203 = vmul.f32 %v1115, %v1125
    %v1204 = vld [vmem:[%s3] sm:$0x3]
    %v1206 = vlaneseq
    %v1207 = vshrl.u32 %v1206, 7
    %v1208 = vsub.s32 0, %v1207
    %v1209 = vrot.slane %v1204, %v1208
    %v1210 = vlaneseq
    %v1211 = vshrl.u32 %v1210, 7
    %v1212 = vsub.s32 1, %v1211
    %v1213 = vrot.slane %v1204, %v1212
    %v1216 = vadd.f32 %v1128, %v1209
    %v1217 = vadd.f32 %v1129, %v1213
    %v1218 = vadd.f32 %v1130, %v1209
    %v1219 = vadd.f32 %v1131, %v1213
    %v1220 = vadd.f32 %v1132, %v1209
    %v1221 = vadd.f32 %v1133, %v1213
    %v1222 = vadd.f32 %v1134, %v1209
    %v1223 = vadd.f32 %v1135, %v1213
    %v1224 = vadd.f32 %v1136, %v1209
    %v1225 = vadd.f32 %v1137, %v1213
    %v1226 = vadd.f32 %v1138, %v1209
    %v1227 = vadd.f32 %v1139, %v1213
    %v1228 = vadd.f32 %v1140, %v1209
    %v1229 = vadd.f32 %v1141, %v1213
    %v1230 = vadd.f32 %v1142, %v1209
    %v1231 = vadd.f32 %v1143, %v1213
    %v1232 = vadd.f32 %v1144, %v1209
    %v1233 = vadd.f32 %v1145, %v1213
    %v1234 = vadd.f32 %v1146, %v1209
    %v1235 = vadd.f32 %v1147, %v1213
    %v1236 = vadd.f32 %v1148, %v1209
    %v1237 = vadd.f32 %v1149, %v1213
    %v1238 = vadd.f32 %v1150, %v1209
    %v1239 = vadd.f32 %v1151, %v1213
    %v1240 = vadd.f32 %v1152, %v1209
    %v1241 = vadd.f32 %v1153, %v1213
    %v1242 = vadd.f32 %v1154, %v1209
    %v1243 = vadd.f32 %v1155, %v1213
    %v1244 = vadd.f32 %v1156, %v1209
    %v1245 = vadd.f32 %v1157, %v1213
    %v1246 = vadd.f32 %v1158, %v1209
    %v1247 = vadd.f32 %v1159, %v1213
    %v1248 = vadd.f32 %v1160, %v1209
    %v1249 = vadd.f32 %v1161, %v1213
    %v1250 = vadd.f32 %v1162, %v1209
    %v1251 = vadd.f32 %v1163, %v1213
    %v1252 = vadd.f32 %v1164, %v1209
    %v1253 = vadd.f32 %v1165, %v1213
    %v1254 = vadd.f32 %v1166, %v1209
    %v1255 = vadd.f32 %v1167, %v1213
    %v1256 = vadd.f32 %v1168, %v1209
    %v1257 = vadd.f32 %v1169, %v1213
    %v1258 = vadd.f32 %v1170, %v1209
    %v1259 = vadd.f32 %v1171, %v1213
    %v1260 = vadd.f32 %v1172, %v1209
    %v1261 = vadd.f32 %v1173, %v1213
    %v1262 = vadd.f32 %v1174, %v1209
    %v1263 = vadd.f32 %v1175, %v1213
    %v1264 = vadd.f32 %v1176, %v1209
    %v1265 = vadd.f32 %v1177, %v1213
    %v1266 = vadd.f32 %v1178, %v1209
    %v1267 = vadd.f32 %v1179, %v1213
    %v1268 = vadd.f32 %v1180, %v1209
    %v1269 = vadd.f32 %v1181, %v1213
    %v1270 = vadd.f32 %v1182, %v1209
    %v1271 = vadd.f32 %v1183, %v1213
    %v1272 = vadd.f32 %v1184, %v1209
    %v1273 = vadd.f32 %v1185, %v1213
    %v1274 = vadd.f32 %v1186, %v1209
    %v1275 = vadd.f32 %v1187, %v1213
    %v1276 = vadd.f32 %v1188, %v1209
    %v1277 = vadd.f32 %v1189, %v1213
    %v1278 = vadd.f32 %v1190, %v1209
    %v1279 = vadd.f32 %v1191, %v1213
    %v1280 = vadd.f32 %v1192, %v1209
    %v1281 = vadd.f32 %v1193, %v1213
    %v1282 = vadd.f32 %v1194, %v1209
    %v1283 = vadd.f32 %v1195, %v1213
    %v1284 = vadd.f32 %v1196, %v1209
    %v1285 = vadd.f32 %v1197, %v1213
    %v1286 = vadd.f32 %v1198, %v1209
    %v1287 = vadd.f32 %v1199, %v1213
    %v1288 = vadd.f32 %v1200, %v1209
    %v1289 = vadd.f32 %v1201, %v1213
    %v1290 = vadd.f32 %v1202, %v1209
    %v1291 = vadd.f32 %v1203, %v1213
    %v1292 = vpack.c.bf16 %v1218, %v1216
    %v1293 = vpack.c.bf16 %v1219, %v1217
    %v1294 = vpack.c.bf16 %v1222, %v1220
    %v1295 = vpack.c.bf16 %v1223, %v1221
    %v1296 = vpack.c.bf16 %v1226, %v1224
    %v1297 = vpack.c.bf16 %v1227, %v1225
    %v1298 = vpack.c.bf16 %v1230, %v1228
    %v1299 = vpack.c.bf16 %v1231, %v1229
    %v1300 = vpack.c.bf16 %v1234, %v1232
    %v1301 = vpack.c.bf16 %v1235, %v1233
    %v1302 = vpack.c.bf16 %v1238, %v1236
    %v1303 = vpack.c.bf16 %v1239, %v1237
    %v1304 = vpack.c.bf16 %v1242, %v1240
    %v1305 = vpack.c.bf16 %v1243, %v1241
    %v1306 = vpack.c.bf16 %v1246, %v1244
    %v1307 = vpack.c.bf16 %v1247, %v1245
    %v1308 = vpack.c.bf16 %v1250, %v1248
    %v1309 = vpack.c.bf16 %v1251, %v1249
    %v1310 = vpack.c.bf16 %v1254, %v1252
    %v1311 = vpack.c.bf16 %v1255, %v1253
    %v1312 = vpack.c.bf16 %v1258, %v1256
    %v1313 = vpack.c.bf16 %v1259, %v1257
    %v1314 = vpack.c.bf16 %v1262, %v1260
    %v1315 = vpack.c.bf16 %v1263, %v1261
    %v1316 = vpack.c.bf16 %v1266, %v1264
    %v1317 = vpack.c.bf16 %v1267, %v1265
    %v1318 = vpack.c.bf16 %v1270, %v1268
    %v1319 = vpack.c.bf16 %v1271, %v1269
    %v1320 = vpack.c.bf16 %v1274, %v1272
    %v1321 = vpack.c.bf16 %v1275, %v1273
    %v1322 = vpack.c.bf16 %v1278, %v1276
    %v1323 = vpack.c.bf16 %v1279, %v1277
    %v1324 = vpack.c.bf16 %v1282, %v1280
    %v1325 = vpack.c.bf16 %v1283, %v1281
    %v1326 = vpack.c.bf16 %v1286, %v1284
    %v1327 = vpack.c.bf16 %v1287, %v1285
    %v1328 = vpack.c.bf16 %v1290, %v1288
    %v1329 = vpack.c.bf16 %v1291, %v1289
    %v1330 = vld [vmem:[#allocation7] sm:$0xff]
    %v1331 = vld [vmem:[#allocation7 + $0x8] sm:$0xff]
    %v1332 = vld [vmem:[#allocation7 + $0x10] sm:$0xff]
    %v1333 = vld [vmem:[#allocation7 + $0x18] sm:$0xff]
    %v1334 = vld [vmem:[#allocation7 + $0x20] sm:$0xff]
    %v1335 = vld [vmem:[#allocation7 + $0x28] sm:$0xff]
    %v1336 = vld [vmem:[#allocation7 + $0x30] sm:$0xff]
    %v1337 = vld [vmem:[#allocation7 + $0x38] sm:$0xff]
    %v1338 = vld [vmem:[#allocation7 + $0x40] sm:$0xff]
    %v1339 = vld [vmem:[#allocation7 + $0x48] sm:$0xff]
    %v1340 = vld [vmem:[#allocation7 + $0x50] sm:$0xff]
    %v1341 = vld [vmem:[#allocation7 + $0x58] sm:$0xff]
    %v1342 = vld [vmem:[#allocation7 + $0x60] sm:$0xff]
    %v1343 = vld [vmem:[#allocation7 + $0x68] sm:$0xff]
    %v1344 = vld [vmem:[#allocation7 + $0x70] sm:$0xff]
    %v1345 = vld [vmem:[#allocation7 + $0x78] sm:$0xff]
    %v1346 = vld [vmem:[#allocation7 + $0x80] sm:$0xff]
    %v1347 = vld [vmem:[#allocation7 + $0x88] sm:$0xff]
    %v1348 = vld [vmem:[#allocation7 + $0x90] sm:$0xff]
    %v1349 = vld [vmem:[#allocation7 + $0x98] sm:$0xff]
    %v1350 = vld [vmem:[#allocation7 + $0xa0] sm:$0xff]
    %v1351 = vld [vmem:[#allocation7 + $0xa8] sm:$0xff]
    %v1352 = vld [vmem:[#allocation7 + $0xb0] sm:$0xff]
    %v1353 = vld [vmem:[#allocation7 + $0xb8] sm:$0xff]
    %v1354 = vld [vmem:[#allocation7 + $0xc0] sm:$0xff]
    %v1355 = vld [vmem:[#allocation7 + $0xc8] sm:$0xff]
    %v1356 = vld [vmem:[#allocation7 + $0xd0] sm:$0xff]
    %v1357 = vld [vmem:[#allocation7 + $0xd8] sm:$0xff]
    %v1358 = vld [vmem:[#allocation7 + $0xe0] sm:$0xff]
    %v1359 = vld [vmem:[#allocation7 + $0xe8] sm:$0xff]
    %v1360 = vld [vmem:[#allocation7 + $0xf0] sm:$0xff]
    %v1361 = vld [vmem:[#allocation7 + $0xf8] sm:$0xff]
    %v1362 = vld [vmem:[%s5] sm:$0x3]
    %v1364 = vlaneseq
    %v1365 = vshrl.u32 %v1364, 7
    %v1366 = vsub.s32 0, %v1365
    %v1367 = vrot.slane %v1362, %v1366
    %v1368 = vlaneseq
    %v1369 = vshrl.u32 %v1368, 7
    %v1370 = vsub.s32 1, %v1369
    %v1371 = vrot.slane %v1362, %v1370
    %v1406 = vunpack.c.l.b16 %v1330
    %v1407 = vunpack.c.h.b16 %v1330
    %v1408 = vunpack.c.l.b16 %v1331
    %v1409 = vunpack.c.h.b16 %v1331
    %v1410 = vunpack.c.l.b16 %v1332
    %v1411 = vunpack.c.h.b16 %v1332
    %v1412 = vunpack.c.l.b16 %v1333
    %v1413 = vunpack.c.h.b16 %v1333
    %v1414 = vunpack.c.l.b16 %v1334
    %v1415 = vunpack.c.h.b16 %v1334
    %v1416 = vunpack.c.l.b16 %v1335
    %v1417 = vunpack.c.h.b16 %v1335
    %v1418 = vunpack.c.l.b16 %v1336
    %v1419 = vunpack.c.h.b16 %v1336
    %v1420 = vunpack.c.l.b16 %v1337
    %v1421 = vunpack.c.h.b16 %v1337
    %v1422 = vunpack.c.l.b16 %v1338
    %v1423 = vunpack.c.h.b16 %v1338
    %v1424 = vunpack.c.l.b16 %v1339
    %v1425 = vunpack.c.h.b16 %v1339
    %v1426 = vunpack.c.l.b16 %v1340
    %v1427 = vunpack.c.h.b16 %v1340
    %v1428 = vunpack.c.l.b16 %v1341
    %v1429 = vunpack.c.h.b16 %v1341
    %v1430 = vunpack.c.l.b16 %v1342
    %v1431 = vunpack.c.h.b16 %v1342
    %v1432 = vunpack.c.l.b16 %v1343
    %v1433 = vunpack.c.h.b16 %v1343
    %v1434 = vunpack.c.l.b16 %v1344
    %v1435 = vunpack.c.h.b16 %v1344
    %v1436 = vunpack.c.l.b16 %v1345
    %v1437 = vunpack.c.h.b16 %v1345
    %v1438 = vunpack.c.l.b16 %v1346
    %v1439 = vunpack.c.h.b16 %v1346
    %v1440 = vunpack.c.l.b16 %v1347
    %v1441 = vunpack.c.h.b16 %v1347
    %v1442 = vunpack.c.l.b16 %v1348
    %v1443 = vunpack.c.h.b16 %v1348
    %v1444 = vunpack.c.l.b16 %v1349
    %v1445 = vunpack.c.h.b16 %v1349
    %v1446 = vunpack.c.l.b16 %v1350
    %v1447 = vunpack.c.h.b16 %v1350
    %v1448 = vunpack.c.l.b16 %v1351
    %v1449 = vunpack.c.h.b16 %v1351
    %v1450 = vunpack.c.l.b16 %v1352
    %v1451 = vunpack.c.h.b16 %v1352
    %v1452 = vunpack.c.l.b16 %v1353
    %v1453 = vunpack.c.h.b16 %v1353
    %v1454 = vunpack.c.l.b16 %v1354
    %v1455 = vunpack.c.h.b16 %v1354
    %v1456 = vunpack.c.l.b16 %v1355
    %v1457 = vunpack.c.h.b16 %v1355
    %v1458 = vunpack.c.l.b16 %v1356
    %v1459 = vunpack.c.h.b16 %v1356
    %v1460 = vunpack.c.l.b16 %v1357
    %v1461 = vunpack.c.h.b16 %v1357
    %v1462 = vunpack.c.l.b16 %v1358
    %v1463 = vunpack.c.h.b16 %v1358
    %v1464 = vunpack.c.l.b16 %v1359
    %v1465 = vunpack.c.h.b16 %v1359
    %v1466 = vunpack.c.l.b16 %v1360
    %v1467 = vunpack.c.h.b16 %v1360
    %v1468 = vunpack.c.l.b16 %v1361
    %v1469 = vunpack.c.h.b16 %v1361
    %v1470 = vpack.c.b16 %v1408, %v1406
    %v1471 = vpack.c.b16 %v1409, %v1407
    %v1472 = vpack.c.b16 %v1412, %v1410
    %v1473 = vpack.c.b16 %v1413, %v1411
    %v1474 = vpack.c.b16 %v1416, %v1414
    %v1475 = vpack.c.b16 %v1417, %v1415
    %v1476 = vpack.c.b16 %v1420, %v1418
    %v1477 = vpack.c.b16 %v1421, %v1419
    %v1478 = vpack.c.b16 %v1424, %v1422
    %v1479 = vpack.c.b16 %v1425, %v1423
    %v1480 = vpack.c.b16 %v1428, %v1426
    %v1481 = vpack.c.b16 %v1429, %v1427
    %v1482 = vpack.c.b16 %v1432, %v1430
    %v1483 = vpack.c.b16 %v1433, %v1431
    %v1484 = vpack.c.b16 %v1436, %v1434
    %v1485 = vpack.c.b16 %v1437, %v1435
    %v1486 = vpack.c.b16 %v1440, %v1438
    %v1487 = vpack.c.b16 %v1441, %v1439
    %v1488 = vpack.c.b16 %v1444, %v1442
    %v1489 = vpack.c.b16 %v1445, %v1443
    %v1490 = vpack.c.b16 %v1448, %v1446
    %v1491 = vpack.c.b16 %v1449, %v1447
    %v1492 = vpack.c.b16 %v1452, %v1450
    %v1493 = vpack.c.b16 %v1453, %v1451
    %v1494 = vpack.c.b16 %v1456, %v1454
    %v1495 = vpack.c.b16 %v1457, %v1455
    %v1496 = vpack.c.b16 %v1460, %v1458
    %v1497 = vpack.c.b16 %v1461, %v1459
    %v1498 = vpack.c.b16 %v1464, %v1462
    %v1499 = vpack.c.b16 %v1465, %v1463
    %v1500 = vpack.c.b16 %v1468, %v1466
    %v1501 = vpack.c.b16 %v1469, %v1467
    %1534 = vmatprep.subr.bf16.mxu0 %v1471
    %1535 = vmatpush1.bf16.msra.mxu0 %v1470
    %1536 = vmatprep.subr.bf16.mxu0 %v1473
    %1537 = vmatpush1.bf16.msra.mxu0 %v1472
    %1538 = vmatprep.subr.bf16.mxu0 %v1475
    %1539 = vmatpush1.bf16.msra.mxu0 %v1474
    %1540 = vmatprep.subr.bf16.mxu0 %v1477
    %1541 = vmatpush1.bf16.msra.mxu0 %v1476
    %1542 = vmatprep.subr.bf16.mxu0 %v1479
    %1543 = vmatpush1.bf16.msra.mxu0 %v1478
    %1544 = vmatprep.subr.bf16.mxu0 %v1481
    %1545 = vmatpush1.bf16.msra.mxu0 %v1480
    %1546 = vmatprep.subr.bf16.mxu0 %v1483
    %1547 = vmatpush1.bf16.msra.mxu0 %v1482
    %1548 = vmatprep.subr.bf16.mxu0 %v1485
    %1549 = vmatpush1.bf16.msra.mxu0 %v1484
    %1550 = vmatprep.subr.bf16.mxu0 %v1487
    %1551 = vmatpush1.bf16.msra.mxu0 %v1486
    %1552 = vmatprep.subr.bf16.mxu0 %v1489
    %1553 = vmatpush1.bf16.msra.mxu0 %v1488
    %1554 = vmatprep.subr.bf16.mxu0 %v1491
    %1555 = vmatpush1.bf16.msra.mxu0 %v1490
    %1556 = vmatprep.subr.bf16.mxu0 %v1493
    %1557 = vmatpush1.bf16.msra.mxu0 %v1492
    %1558 = vmatprep.subr.bf16.mxu0 %v1495
    %1559 = vmatpush1.bf16.msra.mxu0 %v1494
    %1560 = vmatprep.subr.bf16.mxu0 %v1497
    %1561 = vmatpush1.bf16.msra.mxu0 %v1496
    %1562 = vmatprep.subr.bf16.mxu0 %v1499
    %1563 = vmatpush1.bf16.msra.mxu0 %v1498
    %1564 = vmatprep.subr.bf16.mxu0 %v1501
    %1565 = vmatpush1.bf16.msra.mxu0 %v1500
    %1566 = vmatprep.mubr.bf16.mxu0 %v1293
    %1567 = vmatmul.mubr.bf16.gmra.mrb[0].mxu0 %v1292
    %v1568 = vpop.f32.mrb[0].mxu0
    %v1569 = vadd.f32 %v1367, %v1568
    %v1570 = vpop.f32.mrb[0].mxu0
    %v1571 = vadd.f32 %v1371, %v1570
    %v1572 = vpop.f32.mrb[0].mxu0
    %v1573 = vadd.f32 %v1367, %v1572
    %v1574 = vpop.f32.mrb[0].mxu0
    %v1575 = vadd.f32 %v1371, %v1574
    %1576 = vmatprep.mubr.bf16.mxu0 %v1295
    %1577 = vmatmul.mubr.bf16.gmra.mrb[0].mxu0 %v1294
    %v1578 = vpop.f32.mrb[0].mxu0
    %v1579 = vadd.f32 %v1367, %v1578
    %v1580 = vpop.f32.mrb[0].mxu0
    %v1581 = vadd.f32 %v1371, %v1580
    %v1582 = vpop.f32.mrb[0].mxu0
    %v1583 = vadd.f32 %v1367, %v1582
    %v1584 = vpop.f32.mrb[0].mxu0
    %v1585 = vadd.f32 %v1371, %v1584
    %1586 = vmatprep.mubr.bf16.mxu0 %v1297
    %1587 = vmatmul.mubr.bf16.gmra.mrb[0].mxu0 %v1296
    %v1588 = vpop.f32.mrb[0].mxu0
    %v1589 = vadd.f32 %v1367, %v1588
    %v1590 = vpop.f32.mrb[0].mxu0
    %v1591 = vadd.f32 %v1371, %v1590
    %v1592 = vpop.f32.mrb[0].mxu0
    %v1593 = vadd.f32 %v1367, %v1592
    %v1594 = vpop.f32.mrb[0].mxu0
    %v1595 = vadd.f32 %v1371, %v1594
    %1596 = vmatprep.mubr.bf16.mxu0 %v1299
    %1597 = vmatmul.mubr.bf16.gmra.mrb[0].mxu0 %v1298
    %v1598 = vpop.f32.mrb[0].mxu0
    %v1599 = vadd.f32 %v1367, %v1598
    %v1600 = vpop.f32.mrb[0].mxu0
    %v1601 = vadd.f32 %v1371, %v1600
    %v1602 = vpop.f32.mrb[0].mxu0
    %v1603 = vadd.f32 %v1367, %v1602
    %v1604 = vpop.f32.mrb[0].mxu0
    %v1605 = vadd.f32 %v1371, %v1604
    %1606 = vmatprep.mubr.bf16.mxu0 %v1301
    %1607 = vmatmul.mubr.bf16.gmra.mrb[0].mxu0 %v1300
    %v1608 = vpop.f32.mrb[0].mxu0
    %v1609 = vadd.f32 %v1367, %v1608
    %v1610 = vpop.f32.mrb[0].mxu0
    %v1611 = vadd.f32 %v1371, %v1610
    %v1612 = vpop.f32.mrb[0].mxu0
    %v1613 = vadd.f32 %v1367, %v1612
    %v1614 = vpop.f32.mrb[0].mxu0
    %v1615 = vadd.f32 %v1371, %v1614
    %1616 = vmatprep.mubr.bf16.mxu0 %v1303
    %1617 = vmatmul.mubr.bf16.gmra.mrb[0].mxu0 %v1302
    %v1618 = vpop.f32.mrb[0].mxu0
    %v1619 = vadd.f32 %v1367, %v1618
    %v1620 = vpop.f32.mrb[0].mxu0
    %v1621 = vadd.f32 %v1371, %v1620
    %v1622 = vpop.f32.mrb[0].mxu0
    %v1623 = vadd.f32 %v1367, %v1622
    %v1624 = vpop.f32.mrb[0].mxu0
    %v1625 = vadd.f32 %v1371, %v1624
    %1626 = vmatprep.mubr.bf16.mxu0 %v1305
    %1627 = vmatmul.mubr.bf16.gmra.mrb[0].mxu0 %v1304
    %v1628 = vpop.f32.mrb[0].mxu0
    %v1629 = vadd.f32 %v1367, %v1628
    %v1630 = vpop.f32.mrb[0].mxu0
    %v1631 = vadd.f32 %v1371, %v1630
    %v1632 = vpop.f32.mrb[0].mxu0
    %v1633 = vadd.f32 %v1367, %v1632
    %v1634 = vpop.f32.mrb[0].mxu0
    %v1635 = vadd.f32 %v1371, %v1634
    %1636 = vmatprep.mubr.bf16.mxu0 %v1307
    %1637 = vmatmul.mubr.bf16.gmra.mrb[0].mxu0 %v1306
    %v1638 = vpop.f32.mrb[0].mxu0
    %v1639 = vadd.f32 %v1367, %v1638
    %v1640 = vpop.f32.mrb[0].mxu0
    %v1641 = vadd.f32 %v1371, %v1640
    %v1642 = vpop.f32.mrb[0].mxu0
    %v1643 = vadd.f32 %v1367, %v1642
    %v1644 = vpop.f32.mrb[0].mxu0
    %v1645 = vadd.f32 %v1371, %v1644
    %1646 = vmatprep.mubr.bf16.mxu0 %v1309
    %1647 = vmatmul.mubr.bf16.gmra.mrb[0].mxu0 %v1308
    %v1648 = vpop.f32.mrb[0].mxu0
    %v1649 = vadd.f32 %v1367, %v1648
    %v1650 = vpop.f32.mrb[0].mxu0
    %v1651 = vadd.f32 %v1371, %v1650
    %v1652 = vpop.f32.mrb[0].mxu0
    %v1653 = vadd.f32 %v1367, %v1652
    %v1654 = vpop.f32.mrb[0].mxu0
    %v1655 = vadd.f32 %v1371, %v1654
    %1656 = vmatprep.mubr.bf16.mxu0 %v1311
    %1657 = vmatmul.mubr.bf16.gmra.mrb[0].mxu0 %v1310
    %v1658 = vpop.f32.mrb[0].mxu0
    %v1659 = vadd.f32 %v1367, %v1658
    %v1660 = vpop.f32.mrb[0].mxu0
    %v1661 = vadd.f32 %v1371, %v1660
    %v1662 = vpop.f32.mrb[0].mxu0
    %v1663 = vadd.f32 %v1367, %v1662
    %v1664 = vpop.f32.mrb[0].mxu0
    %v1665 = vadd.f32 %v1371, %v1664
    %1666 = vmatprep.mubr.bf16.mxu0 %v1313
    %1667 = vmatmul.mubr.bf16.gmra.mrb[0].mxu0 %v1312
    %v1668 = vpop.f32.mrb[0].mxu0
    %v1669 = vadd.f32 %v1367, %v1668
    %v1670 = vpop.f32.mrb[0].mxu0
    %v1671 = vadd.f32 %v1371, %v1670
    %v1672 = vpop.f32.mrb[0].mxu0
    %v1673 = vadd.f32 %v1367, %v1672
    %v1674 = vpop.f32.mrb[0].mxu0
    %v1675 = vadd.f32 %v1371, %v1674
    %1676 = vmatprep.mubr.bf16.mxu0 %v1315
    %1677 = vmatmul.mubr.bf16.gmra.mrb[0].mxu0 %v1314
    %v1678 = vpop.f32.mrb[0].mxu0
    %v1679 = vadd.f32 %v1367, %v1678
    %v1680 = vpop.f32.mrb[0].mxu0
    %v1681 = vadd.f32 %v1371, %v1680
    %v1682 = vpop.f32.mrb[0].mxu0
    %v1683 = vadd.f32 %v1367, %v1682
    %v1684 = vpop.f32.mrb[0].mxu0
    %v1685 = vadd.f32 %v1371, %v1684
    %1686 = vmatprep.mubr.bf16.mxu0 %v1317
    %1687 = vmatmul.mubr.bf16.gmra.mrb[0].mxu0 %v1316
    %v1688 = vpop.f32.mrb[0].mxu0
    %v1689 = vadd.f32 %v1367, %v1688
    %v1690 = vpop.f32.mrb[0].mxu0
    %v1691 = vadd.f32 %v1371, %v1690
    %v1692 = vpop.f32.mrb[0].mxu0
    %v1693 = vadd.f32 %v1367, %v1692
    %v1694 = vpop.f32.mrb[0].mxu0
    %v1695 = vadd.f32 %v1371, %v1694
    %1696 = vmatprep.mubr.bf16.mxu0 %v1319
    %1697 = vmatmul.mubr.bf16.gmra.mrb[0].mxu0 %v1318
    %v1698 = vpop.f32.mrb[0].mxu0
    %v1699 = vadd.f32 %v1367, %v1698
    %v1700 = vpop.f32.mrb[0].mxu0
    %v1701 = vadd.f32 %v1371, %v1700
    %v1702 = vpop.f32.mrb[0].mxu0
    %v1703 = vadd.f32 %v1367, %v1702
    %v1704 = vpop.f32.mrb[0].mxu0
    %v1705 = vadd.f32 %v1371, %v1704
    %1706 = vmatprep.mubr.bf16.mxu0 %v1321
    %1707 = vmatmul.mubr.bf16.gmra.mrb[0].mxu0 %v1320
    %v1708 = vpop.f32.mrb[0].mxu0
    %v1709 = vadd.f32 %v1367, %v1708
    %v1710 = vpop.f32.mrb[0].mxu0
    %v1711 = vadd.f32 %v1371, %v1710
    %v1712 = vpop.f32.mrb[0].mxu0
    %v1713 = vadd.f32 %v1367, %v1712
    %v1714 = vpop.f32.mrb[0].mxu0
    %v1715 = vadd.f32 %v1371, %v1714
    %1716 = vmatprep.mubr.bf16.mxu0 %v1323
    %1717 = vmatmul.mubr.bf16.gmra.mrb[0].mxu0 %v1322
    %v1718 = vpop.f32.mrb[0].mxu0
    %v1719 = vadd.f32 %v1367, %v1718
    %v1720 = vpop.f32.mrb[0].mxu0
    %v1721 = vadd.f32 %v1371, %v1720
    %v1722 = vpop.f32.mrb[0].mxu0
    %v1723 = vadd.f32 %v1367, %v1722
    %v1724 = vpop.f32.mrb[0].mxu0
    %v1725 = vadd.f32 %v1371, %v1724
    %1726 = vmatprep.mubr.bf16.mxu0 %v1325
    %1727 = vmatmul.mubr.bf16.gmra.mrb[0].mxu0 %v1324
    %v1728 = vpop.f32.mrb[0].mxu0
    %v1729 = vadd.f32 %v1367, %v1728
    %v1730 = vpop.f32.mrb[0].mxu0
    %v1731 = vadd.f32 %v1371, %v1730
    %v1732 = vpop.f32.mrb[0].mxu0
    %v1733 = vadd.f32 %v1367, %v1732
    %v1734 = vpop.f32.mrb[0].mxu0
    %v1735 = vadd.f32 %v1371, %v1734
    %1736 = vmatprep.mubr.bf16.mxu0 %v1327
    %1737 = vmatmul.mubr.bf16.gmra.mrb[0].mxu0 %v1326
    %v1738 = vpop.f32.mrb[0].mxu0
    %v1739 = vadd.f32 %v1367, %v1738
    %v1740 = vpop.f32.mrb[0].mxu0
    %v1741 = vadd.f32 %v1371, %v1740
    %v1742 = vpop.f32.mrb[0].mxu0
    %v1743 = vadd.f32 %v1367, %v1742
    %v1744 = vpop.f32.mrb[0].mxu0
    %v1745 = vadd.f32 %v1371, %v1744
    %1746 = vmatprep.mubr.bf16.mxu0 %v1329
    %1747 = vmatmul.mubr.bf16.gmra.mrb[0].mxu0 %v1328
    %v1748 = vpop.f32.mrb[0].mxu0
    %v1749 = vadd.f32 %v1367, %v1748
    %v1750 = vpop.f32.mrb[0].mxu0
    %v1751 = vadd.f32 %v1371, %v1750
    %v1752 = vpop.f32.mrb[0].mxu0
    %v1753 = vadd.f32 %v1367, %v1752
    %v1754 = vpop.f32.mrb[0].mxu0
    %v1755 = vadd.f32 %v1371, %v1754
    %1756 = vdwg.mxu0
    %v1757 = vmul.f32 %v1569, 1.702
    %v1758 = vmul.f32 %v1571, 1.702
    %v1759 = vmul.f32 %v1573, 1.702
    %v1760 = vmul.f32 %v1575, 1.702
    %v1761 = vmul.f32 %v1579, 1.702
    %v1762 = vmul.f32 %v1581, 1.702
    %v1763 = vmul.f32 %v1583, 1.702
    %v1764 = vmul.f32 %v1585, 1.702
    %v1765 = vmul.f32 %v1589, 1.702
    %v1766 = vmul.f32 %v1591, 1.702
    %v1767 = vmul.f32 %v1593, 1.702
    %v1768 = vmul.f32 %v1595, 1.702
    %v1769 = vmul.f32 %v1599, 1.702
    %v1770 = vmul.f32 %v1601, 1.702
    %v1771 = vmul.f32 %v1603, 1.702
    %v1772 = vmul.f32 %v1605, 1.702
    %v1773 = vmul.f32 %v1609, 1.702
    %v1774 = vmul.f32 %v1611, 1.702
    %v1775 = vmul.f32 %v1613, 1.702
    %v1776 = vmul.f32 %v1615, 1.702
    %v1777 = vmul.f32 %v1619, 1.702
    %v1778 = vmul.f32 %v1621, 1.702
    %v1779 = vmul.f32 %v1623, 1.702
    %v1780 = vmul.f32 %v1625, 1.702
    %v1781 = vmul.f32 %v1629, 1.702
    %v1782 = vmul.f32 %v1631, 1.702
    %v1783 = vmul.f32 %v1633, 1.702
    %v1784 = vmul.f32 %v1635, 1.702
    %v1785 = vmul.f32 %v1639, 1.702
    %v1786 = vmul.f32 %v1641, 1.702
    %v1787 = vmul.f32 %v1643, 1.702
    %v1788 = vmul.f32 %v1645, 1.702
    %v1789 = vmul.f32 %v1649, 1.702
    %v1790 = vmul.f32 %v1651, 1.702
    %v1791 = vmul.f32 %v1653, 1.702
    %v1792 = vmul.f32 %v1655, 1.702
    %v1793 = vmul.f32 %v1659, 1.702
    %v1794 = vmul.f32 %v1661, 1.702
    %v1795 = vmul.f32 %v1663, 1.702
    %v1796 = vmul.f32 %v1665, 1.702
    %v1797 = vmul.f32 %v1669, 1.702
    %v1798 = vmul.f32 %v1671, 1.702
    %v1799 = vmul.f32 %v1673, 1.702
    %v1800 = vmul.f32 %v1675, 1.702
    %v1801 = vmul.f32 %v1679, 1.702
    %v1802 = vmul.f32 %v1681, 1.702
    %v1803 = vmul.f32 %v1683, 1.702
    %v1804 = vmul.f32 %v1685, 1.702
    %v1805 = vmul.f32 %v1689, 1.702
    %v1806 = vmul.f32 %v1691, 1.702
    %v1807 = vmul.f32 %v1693, 1.702
    %v1808 = vmul.f32 %v1695, 1.702
    %v1809 = vmul.f32 %v1699, 1.702
    %v1810 = vmul.f32 %v1701, 1.702
    %v1811 = vmul.f32 %v1703, 1.702
    %v1812 = vmul.f32 %v1705, 1.702
    %v1813 = vmul.f32 %v1709, 1.702
    %v1814 = vmul.f32 %v1711, 1.702
    %v1815 = vmul.f32 %v1713, 1.702
    %v1816 = vmul.f32 %v1715, 1.702
    %v1817 = vmul.f32 %v1719, 1.702
    %v1818 = vmul.f32 %v1721, 1.702
    %v1819 = vmul.f32 %v1723, 1.702
    %v1820 = vmul.f32 %v1725, 1.702
    %v1821 = vmul.f32 %v1729, 1.702
    %v1822 = vmul.f32 %v1731, 1.702
    %v1823 = vmul.f32 %v1733, 1.702
    %v1824 = vmul.f32 %v1735, 1.702
    %v1825 = vmul.f32 %v1739, 1.702
    %v1826 = vmul.f32 %v1741, 1.702
    %v1827 = vmul.f32 %v1743, 1.702
    %v1828 = vmul.f32 %v1745, 1.702
    %v1829 = vmul.f32 %v1749, 1.702
    %v1830 = vmul.f32 %v1751, 1.702
    %v1831 = vmul.f32 %v1753, 1.702
    %v1832 = vmul.f32 %v1755, 1.702
    %v1833 = vxor.u32 %v1757, 2147483648
    %v1834 = vxor.u32 %v1758, 2147483648
    %v1835 = vxor.u32 %v1759, 2147483648
    %v1836 = vxor.u32 %v1760, 2147483648
    %v1837 = vxor.u32 %v1761, 2147483648
    %v1838 = vxor.u32 %v1762, 2147483648
    %v1839 = vxor.u32 %v1763, 2147483648
    %v1840 = vxor.u32 %v1764, 2147483648
    %v1841 = vxor.u32 %v1765, 2147483648
    %v1842 = vxor.u32 %v1766, 2147483648
    %v1843 = vxor.u32 %v1767, 2147483648
    %v1844 = vxor.u32 %v1768, 2147483648
    %v1845 = vxor.u32 %v1769, 2147483648
    %v1846 = vxor.u32 %v1770, 2147483648
    %v1847 = vxor.u32 %v1771, 2147483648
    %v1848 = vxor.u32 %v1772, 2147483648
    %v1849 = vxor.u32 %v1773, 2147483648
    %v1850 = vxor.u32 %v1774, 2147483648
    %v1851 = vxor.u32 %v1775, 2147483648
    %v1852 = vxor.u32 %v1776, 2147483648
    %v1853 = vxor.u32 %v1777, 2147483648
    %v1854 = vxor.u32 %v1778, 2147483648
    %v1855 = vxor.u32 %v1779, 2147483648
    %v1856 = vxor.u32 %v1780, 2147483648
    %v1857 = vxor.u32 %v1781, 2147483648
    %v1858 = vxor.u32 %v1782, 2147483648
    %v1859 = vxor.u32 %v1783, 2147483648
    %v1860 = vxor.u32 %v1784, 2147483648
    %v1861 = vxor.u32 %v1785, 2147483648
    %v1862 = vxor.u32 %v1786, 2147483648
    %v1863 = vxor.u32 %v1787, 2147483648
    %v1864 = vxor.u32 %v1788, 2147483648
    %v1865 = vxor.u32 %v1789, 2147483648
    %v1866 = vxor.u32 %v1790, 2147483648
    %v1867 = vxor.u32 %v1791, 2147483648
    %v1868 = vxor.u32 %v1792, 2147483648
    %v1869 = vxor.u32 %v1793, 2147483648
    %v1870 = vxor.u32 %v1794, 2147483648
    %v1871 = vxor.u32 %v1795, 2147483648
    %v1872 = vxor.u32 %v1796, 2147483648
    %v1873 = vxor.u32 %v1797, 2147483648
    %v1874 = vxor.u32 %v1798, 2147483648
    %v1875 = vxor.u32 %v1799, 2147483648
    %v1876 = vxor.u32 %v1800, 2147483648
    %v1877 = vxor.u32 %v1801, 2147483648
    %v1878 = vxor.u32 %v1802, 2147483648
    %v1879 = vxor.u32 %v1803, 2147483648
    %v1880 = vxor.u32 %v1804, 2147483648
    %v1881 = vxor.u32 %v1805, 2147483648
    %v1882 = vxor.u32 %v1806, 2147483648
    %v1883 = vxor.u32 %v1807, 2147483648
    %v1884 = vxor.u32 %v1808, 2147483648
    %v1885 = vxor.u32 %v1809, 2147483648
    %v1886 = vxor.u32 %v1810, 2147483648
    %v1887 = vxor.u32 %v1811, 2147483648
    %v1888 = vxor.u32 %v1812, 2147483648
    %v1889 = vxor.u32 %v1813, 2147483648
    %v1890 = vxor.u32 %v1814, 2147483648
    %v1891 = vxor.u32 %v1815, 2147483648
    %v1892 = vxor.u32 %v1816, 2147483648
    %v1893 = vxor.u32 %v1817, 2147483648
    %v1894 = vxor.u32 %v1818, 2147483648
    %v1895 = vxor.u32 %v1819, 2147483648
    %v1896 = vxor.u32 %v1820, 2147483648
    %v1897 = vxor.u32 %v1821, 2147483648
    %v1898 = vxor.u32 %v1822, 2147483648
    %v1899 = vxor.u32 %v1823, 2147483648
    %v1900 = vxor.u32 %v1824, 2147483648
    %v1901 = vxor.u32 %v1825, 2147483648
    %v1902 = vxor.u32 %v1826, 2147483648
    %v1903 = vxor.u32 %v1827, 2147483648
    %v1904 = vxor.u32 %v1828, 2147483648
    %v1905 = vxor.u32 %v1829, 2147483648
    %v1906 = vxor.u32 %v1830, 2147483648
    %v1907 = vxor.u32 %v1831, 2147483648
    %v1908 = vxor.u32 %v1832, 2147483648
    %v1909 = vmul.f32 %v1833, 1.442695
    %v1910 = vpow.pop %v1909
    %v1911 = vmul.f32 %v1834, 1.442695
    %v1912 = vpow.pop %v1911
    %v1913 = vmul.f32 %v1835, 1.442695
    %v1914 = vpow.pop %v1913
    %v1915 = vmul.f32 %v1836, 1.442695
    %v1916 = vpow.pop %v1915
    %v1917 = vmul.f32 %v1837, 1.442695
    %v1918 = vpow.pop %v1917
    %v1919 = vmul.f32 %v1838, 1.442695
    %v1920 = vpow.pop %v1919
    %v1921 = vmul.f32 %v1839, 1.442695
    %v1922 = vpow.pop %v1921
    %v1923 = vmul.f32 %v1840, 1.442695
    %v1924 = vpow.pop %v1923
    %v1925 = vmul.f32 %v1841, 1.442695
    %v1926 = vpow.pop %v1925
    %v1927 = vmul.f32 %v1842, 1.442695
    %v1928 = vpow.pop %v1927
    %v1929 = vmul.f32 %v1843, 1.442695
    %v1930 = vpow.pop %v1929
    %v1931 = vmul.f32 %v1844, 1.442695
    %v1932 = vpow.pop %v1931
    %v1933 = vmul.f32 %v1845, 1.442695
    %v1934 = vpow.pop %v1933
    %v1935 = vmul.f32 %v1846, 1.442695
    %v1936 = vpow.pop %v1935
    %v1937 = vmul.f32 %v1847, 1.442695
    %v1938 = vpow.pop %v1937
    %v1939 = vmul.f32 %v1848, 1.442695
    %v1940 = vpow.pop %v1939
    %v1941 = vmul.f32 %v1849, 1.442695
    %v1942 = vpow.pop %v1941
    %v1943 = vmul.f32 %v1850, 1.442695
    %v1944 = vpow.pop %v1943
    %v1945 = vmul.f32 %v1851, 1.442695
    %v1946 = vpow.pop %v1945
    %v1947 = vmul.f32 %v1852, 1.442695
    %v1948 = vpow.pop %v1947
    %v1949 = vmul.f32 %v1853, 1.442695
    %v1950 = vpow.pop %v1949
    %v1951 = vmul.f32 %v1854, 1.442695
    %v1952 = vpow.pop %v1951
    %v1953 = vmul.f32 %v1855, 1.442695
    %v1954 = vpow.pop %v1953
    %v1955 = vmul.f32 %v1856, 1.442695
    %v1956 = vpow.pop %v1955
    %v1957 = vmul.f32 %v1857, 1.442695
    %v1958 = vpow.pop %v1957
    %v1959 = vmul.f32 %v1858, 1.442695
    %v1960 = vpow.pop %v1959
    %v1961 = vmul.f32 %v1859, 1.442695
    %v1962 = vpow.pop %v1961
    %v1963 = vmul.f32 %v1860, 1.442695
    %v1964 = vpow.pop %v1963
    %v1965 = vmul.f32 %v1861, 1.442695
    %v1966 = vpow.pop %v1965
    %v1967 = vmul.f32 %v1862, 1.442695
    %v1968 = vpow.pop %v1967
    %v1969 = vmul.f32 %v1863, 1.442695
    %v1970 = vpow.pop %v1969
    %v1971 = vmul.f32 %v1864, 1.442695
    %v1972 = vpow.pop %v1971
    %v1973 = vmul.f32 %v1865, 1.442695
    %v1974 = vpow.pop %v1973
    %v1975 = vmul.f32 %v1866, 1.442695
    %v1976 = vpow.pop %v1975
    %v1977 = vmul.f32 %v1867, 1.442695
    %v1978 = vpow.pop %v1977
    %v1979 = vmul.f32 %v1868, 1.442695
    %v1980 = vpow.pop %v1979
    %v1981 = vmul.f32 %v1869, 1.442695
    %v1982 = vpow.pop %v1981
    %v1983 = vmul.f32 %v1870, 1.442695
    %v1984 = vpow.pop %v1983
    %v1985 = vmul.f32 %v1871, 1.442695
    %v1986 = vpow.pop %v1985
    %v1987 = vmul.f32 %v1872, 1.442695
    %v1988 = vpow.pop %v1987
    %v1989 = vmul.f32 %v1873, 1.442695
    %v1990 = vpow.pop %v1989
    %v1991 = vmul.f32 %v1874, 1.442695
    %v1992 = vpow.pop %v1991
    %v1993 = vmul.f32 %v1875, 1.442695
    %v1994 = vpow.pop %v1993
    %v1995 = vmul.f32 %v1876, 1.442695
    %v1996 = vpow.pop %v1995
    %v1997 = vmul.f32 %v1877, 1.442695
    %v1998 = vpow.pop %v1997
    %v1999 = vmul.f32 %v1878, 1.442695
    %v2000 = vpow.pop %v1999
    %v2001 = vmul.f32 %v1879, 1.442695
    %v2002 = vpow.pop %v2001
    %v2003 = vmul.f32 %v1880, 1.442695
    %v2004 = vpow.pop %v2003
    %v2005 = vmul.f32 %v1881, 1.442695
    %v2006 = vpow.pop %v2005
    %v2007 = vmul.f32 %v1882, 1.442695
    %v2008 = vpow.pop %v2007
    %v2009 = vmul.f32 %v1883, 1.442695
    %v2010 = vpow.pop %v2009
    %v2011 = vmul.f32 %v1884, 1.442695
    %v2012 = vpow.pop %v2011
    %v2013 = vmul.f32 %v1885, 1.442695
    %v2014 = vpow.pop %v2013
    %v2015 = vmul.f32 %v1886, 1.442695
    %v2016 = vpow.pop %v2015
    %v2017 = vmul.f32 %v1887, 1.442695
    %v2018 = vpow.pop %v2017
    %v2019 = vmul.f32 %v1888, 1.442695
    %v2020 = vpow.pop %v2019
    %v2021 = vmul.f32 %v1889, 1.442695
    %v2022 = vpow.pop %v2021
    %v2023 = vmul.f32 %v1890, 1.442695
    %v2024 = vpow.pop %v2023
    %v2025 = vmul.f32 %v1891, 1.442695
    %v2026 = vpow.pop %v2025
    %v2027 = vmul.f32 %v1892, 1.442695
    %v2028 = vpow.pop %v2027
    %v2029 = vmul.f32 %v1893, 1.442695
    %v2030 = vpow.pop %v2029
    %v2031 = vmul.f32 %v1894, 1.442695
    %v2032 = vpow.pop %v2031
    %v2033 = vmul.f32 %v1895, 1.442695
    %v2034 = vpow.pop %v2033
    %v2035 = vmul.f32 %v1896, 1.442695
    %v2036 = vpow.pop %v2035
    %v2037 = vmul.f32 %v1897, 1.442695
    %v2038 = vpow.pop %v2037
    %v2039 = vmul.f32 %v1898, 1.442695
    %v2040 = vpow.pop %v2039
    %v2041 = vmul.f32 %v1899, 1.442695
    %v2042 = vpow.pop %v2041
    %v2043 = vmul.f32 %v1900, 1.442695
    %v2044 = vpow.pop %v2043
    %v2045 = vmul.f32 %v1901, 1.442695
    %v2046 = vpow.pop %v2045
    %v2047 = vmul.f32 %v1902, 1.442695
    %v2048 = vpow.pop %v2047
    %v2049 = vmul.f32 %v1903, 1.442695
    %v2050 = vpow.pop %v2049
    %v2051 = vmul.f32 %v1904, 1.442695
    %v2052 = vpow.pop %v2051
    %v2053 = vmul.f32 %v1905, 1.442695
    %v2054 = vpow.pop %v2053
    %v2055 = vmul.f32 %v1906, 1.442695
    %v2056 = vpow.pop %v2055
    %v2057 = vmul.f32 %v1907, 1.442695
    %v2058 = vpow.pop %v2057
    %v2059 = vmul.f32 %v1908, 1.442695
    %v2060 = vpow.pop %v2059
    %v2061 = vadd.f32 %v1910, 1.0
    %v2062 = vadd.f32 %v1912, 1.0
    %v2063 = vadd.f32 %v1914, 1.0
    %v2064 = vadd.f32 %v1916, 1.0
    %v2065 = vadd.f32 %v1918, 1.0
    %v2066 = vadd.f32 %v1920, 1.0
    %v2067 = vadd.f32 %v1922, 1.0
    %v2068 = vadd.f32 %v1924, 1.0
    %v2069 = vadd.f32 %v1926, 1.0
    %v2070 = vadd.f32 %v1928, 1.0
    %v2071 = vadd.f32 %v1930, 1.0
    %v2072 = vadd.f32 %v1932, 1.0
    %v2073 = vadd.f32 %v1934, 1.0
    %v2074 = vadd.f32 %v1936, 1.0
    %v2075 = vadd.f32 %v1938, 1.0
    %v2076 = vadd.f32 %v1940, 1.0
    %v2077 = vadd.f32 %v1942, 1.0
    %v2078 = vadd.f32 %v1944, 1.0
    %v2079 = vadd.f32 %v1946, 1.0
    %v2080 = vadd.f32 %v1948, 1.0
    %v2081 = vadd.f32 %v1950, 1.0
    %v2082 = vadd.f32 %v1952, 1.0
    %v2083 = vadd.f32 %v1954, 1.0
    %v2084 = vadd.f32 %v1956, 1.0
    %v2085 = vadd.f32 %v1958, 1.0
    %v2086 = vadd.f32 %v1960, 1.0
    %v2087 = vadd.f32 %v1962, 1.0
    %v2088 = vadd.f32 %v1964, 1.0
    %v2089 = vadd.f32 %v1966, 1.0
    %v2090 = vadd.f32 %v1968, 1.0
    %v2091 = vadd.f32 %v1970, 1.0
    %v2092 = vadd.f32 %v1972, 1.0
    %v2093 = vadd.f32 %v1974, 1.0
    %v2094 = vadd.f32 %v1976, 1.0
    %v2095 = vadd.f32 %v1978, 1.0
    %v2096 = vadd.f32 %v1980, 1.0
    %v2097 = vadd.f32 %v1982, 1.0
    %v2098 = vadd.f32 %v1984, 1.0
    %v2099 = vadd.f32 %v1986, 1.0
    %v2100 = vadd.f32 %v1988, 1.0
    %v2101 = vadd.f32 %v1990, 1.0
    %v2102 = vadd.f32 %v1992, 1.0
    %v2103 = vadd.f32 %v1994, 1.0
    %v2104 = vadd.f32 %v1996, 1.0
    %v2105 = vadd.f32 %v1998, 1.0
    %v2106 = vadd.f32 %v2000, 1.0
    %v2107 = vadd.f32 %v2002, 1.0
    %v2108 = vadd.f32 %v2004, 1.0
    %v2109 = vadd.f32 %v2006, 1.0
    %v2110 = vadd.f32 %v2008, 1.0
    %v2111 = vadd.f32 %v2010, 1.0
    %v2112 = vadd.f32 %v2012, 1.0
    %v2113 = vadd.f32 %v2014, 1.0
    %v2114 = vadd.f32 %v2016, 1.0
    %v2115 = vadd.f32 %v2018, 1.0
    %v2116 = vadd.f32 %v2020, 1.0
    %v2117 = vadd.f32 %v2022, 1.0
    %v2118 = vadd.f32 %v2024, 1.0
    %v2119 = vadd.f32 %v2026, 1.0
    %v2120 = vadd.f32 %v2028, 1.0
    %v2121 = vadd.f32 %v2030, 1.0
    %v2122 = vadd.f32 %v2032, 1.0
    %v2123 = vadd.f32 %v2034, 1.0
    %v2124 = vadd.f32 %v2036, 1.0
    %v2125 = vadd.f32 %v2038, 1.0
    %v2126 = vadd.f32 %v2040, 1.0
    %v2127 = vadd.f32 %v2042, 1.0
    %v2128 = vadd.f32 %v2044, 1.0
    %v2129 = vadd.f32 %v2046, 1.0
    %v2130 = vadd.f32 %v2048, 1.0
    %v2131 = vadd.f32 %v2050, 1.0
    %v2132 = vadd.f32 %v2052, 1.0
    %v2133 = vadd.f32 %v2054, 1.0
    %v2134 = vadd.f32 %v2056, 1.0
    %v2135 = vadd.f32 %v2058, 1.0
    %v2136 = vadd.f32 %v2060, 1.0
    %v2137 = vrcp.pop %v2061
    %v2138 = vmul.f32 1.0, %v2137
    %v2139 = vrcp.pop %v2062
    %v2140 = vmul.f32 1.0, %v2139
    %v2141 = vrcp.pop %v2063
    %v2142 = vmul.f32 1.0, %v2141
    %v2143 = vrcp.pop %v2064
    %v2144 = vmul.f32 1.0, %v2143
    %v2145 = vrcp.pop %v2065
    %v2146 = vmul.f32 1.0, %v2145
    %v2147 = vrcp.pop %v2066
    %v2148 = vmul.f32 1.0, %v2147
    %v2149 = vrcp.pop %v2067
    %v2150 = vmul.f32 1.0, %v2149
    %v2151 = vrcp.pop %v2068
    %v2152 = vmul.f32 1.0, %v2151
    %v2153 = vrcp.pop %v2069
    %v2154 = vmul.f32 1.0, %v2153
    %v2155 = vrcp.pop %v2070
    %v2156 = vmul.f32 1.0, %v2155
    %v2157 = vrcp.pop %v2071
    %v2158 = vmul.f32 1.0, %v2157
    %v2159 = vrcp.pop %v2072
    %v2160 = vmul.f32 1.0, %v2159
    %v2161 = vrcp.pop %v2073
    %v2162 = vmul.f32 1.0, %v2161
    %v2163 = vrcp.pop %v2074
    %v2164 = vmul.f32 1.0, %v2163
    %v2165 = vrcp.pop %v2075
    %v2166 = vmul.f32 1.0, %v2165
    %v2167 = vrcp.pop %v2076
    %v2168 = vmul.f32 1.0, %v2167
    %v2169 = vrcp.pop %v2077
    %v2170 = vmul.f32 1.0, %v2169
    %v2171 = vrcp.pop %v2078
    %v2172 = vmul.f32 1.0, %v2171
    %v2173 = vrcp.pop %v2079
    %v2174 = vmul.f32 1.0, %v2173
    %v2175 = vrcp.pop %v2080
    %v2176 = vmul.f32 1.0, %v2175
    %v2177 = vrcp.pop %v2081
    %v2178 = vmul.f32 1.0, %v2177
    %v2179 = vrcp.pop %v2082
    %v2180 = vmul.f32 1.0, %v2179
    %v2181 = vrcp.pop %v2083
    %v2182 = vmul.f32 1.0, %v2181
    %v2183 = vrcp.pop %v2084
    %v2184 = vmul.f32 1.0, %v2183
    %v2185 = vrcp.pop %v2085
    %v2186 = vmul.f32 1.0, %v2185
    %v2187 = vrcp.pop %v2086
    %v2188 = vmul.f32 1.0, %v2187
    %v2189 = vrcp.pop %v2087
    %v2190 = vmul.f32 1.0, %v2189
    %v2191 = vrcp.pop %v2088
    %v2192 = vmul.f32 1.0, %v2191
    %v2193 = vrcp.pop %v2089
    %v2194 = vmul.f32 1.0, %v2193
    %v2195 = vrcp.pop %v2090
    %v2196 = vmul.f32 1.0, %v2195
    %v2197 = vrcp.pop %v2091
    %v2198 = vmul.f32 1.0, %v2197
    %v2199 = vrcp.pop %v2092
    %v2200 = vmul.f32 1.0, %v2199
    %v2201 = vrcp.pop %v2093
    %v2202 = vmul.f32 1.0, %v2201
    %v2203 = vrcp.pop %v2094
    %v2204 = vmul.f32 1.0, %v2203
    %v2205 = vrcp.pop %v2095
    %v2206 = vmul.f32 1.0, %v2205
    %v2207 = vrcp.pop %v2096
    %v2208 = vmul.f32 1.0, %v2207
    %v2209 = vrcp.pop %v2097
    %v2210 = vmul.f32 1.0, %v2209
    %v2211 = vrcp.pop %v2098
    %v2212 = vmul.f32 1.0, %v2211
    %v2213 = vrcp.pop %v2099
    %v2214 = vmul.f32 1.0, %v2213
    %v2215 = vrcp.pop %v2100
    %v2216 = vmul.f32 1.0, %v2215
    %v2217 = vrcp.pop %v2101
    %v2218 = vmul.f32 1.0, %v2217
    %v2219 = vrcp.pop %v2102
    %v2220 = vmul.f32 1.0, %v2219
    %v2221 = vrcp.pop %v2103
    %v2222 = vmul.f32 1.0, %v2221
    %v2223 = vrcp.pop %v2104
    %v2224 = vmul.f32 1.0, %v2223
    %v2225 = vrcp.pop %v2105
    %v2226 = vmul.f32 1.0, %v2225
    %v2227 = vrcp.pop %v2106
    %v2228 = vmul.f32 1.0, %v2227
    %v2229 = vrcp.pop %v2107
    %v2230 = vmul.f32 1.0, %v2229
    %v2231 = vrcp.pop %v2108
    %v2232 = vmul.f32 1.0, %v2231
    %v2233 = vrcp.pop %v2109
    %v2234 = vmul.f32 1.0, %v2233
    %v2235 = vrcp.pop %v2110
    %v2236 = vmul.f32 1.0, %v2235
    %v2237 = vrcp.pop %v2111
    %v2238 = vmul.f32 1.0, %v2237
    %v2239 = vrcp.pop %v2112
    %v2240 = vmul.f32 1.0, %v2239
    %v2241 = vrcp.pop %v2113
    %v2242 = vmul.f32 1.0, %v2241
    %v2243 = vrcp.pop %v2114
    %v2244 = vmul.f32 1.0, %v2243
    %v2245 = vrcp.pop %v2115
    %v2246 = vmul.f32 1.0, %v2245
    %v2247 = vrcp.pop %v2116
    %v2248 = vmul.f32 1.0, %v2247
    %v2249 = vrcp.pop %v2117
    %v2250 = vmul.f32 1.0, %v2249
    %v2251 = vrcp.pop %v2118
    %v2252 = vmul.f32 1.0, %v2251
    %v2253 = vrcp.pop %v2119
    %v2254 = vmul.f32 1.0, %v2253
    %v2255 = vrcp.pop %v2120
    %v2256 = vmul.f32 1.0, %v2255
    %v2257 = vrcp.pop %v2121
    %v2258 = vmul.f32 1.0, %v2257
    %v2259 = vrcp.pop %v2122
    %v2260 = vmul.f32 1.0, %v2259
    %v2261 = vrcp.pop %v2123
    %v2262 = vmul.f32 1.0, %v2261
    %v2263 = vrcp.pop %v2124
    %v2264 = vmul.f32 1.0, %v2263
    %v2265 = vrcp.pop %v2125
    %v2266 = vmul.f32 1.0, %v2265
    %v2267 = vrcp.pop %v2126
    %v2268 = vmul.f32 1.0, %v2267
    %v2269 = vrcp.pop %v2127
    %v2270 = vmul.f32 1.0, %v2269
    %v2271 = vrcp.pop %v2128
    %v2272 = vmul.f32 1.0, %v2271
    %v2273 = vrcp.pop %v2129
    %v2274 = vmul.f32 1.0, %v2273
    %v2275 = vrcp.pop %v2130
    %v2276 = vmul.f32 1.0, %v2275
    %v2277 = vrcp.pop %v2131
    %v2278 = vmul.f32 1.0, %v2277
    %v2279 = vrcp.pop %v2132
    %v2280 = vmul.f32 1.0, %v2279
    %v2281 = vrcp.pop %v2133
    %v2282 = vmul.f32 1.0, %v2281
    %v2283 = vrcp.pop %v2134
    %v2284 = vmul.f32 1.0, %v2283
    %v2285 = vrcp.pop %v2135
    %v2286 = vmul.f32 1.0, %v2285
    %v2287 = vrcp.pop %v2136
    %v2288 = vmul.f32 1.0, %v2287
    %v2289 = vmul.f32 %v1569, %v2138
    %v2290 = vmul.f32 %v1571, %v2140
    %v2291 = vmul.f32 %v1573, %v2142
    %v2292 = vmul.f32 %v1575, %v2144
    %v2293 = vmul.f32 %v1579, %v2146
    %v2294 = vmul.f32 %v1581, %v2148
    %v2295 = vmul.f32 %v1583, %v2150
    %v2296 = vmul.f32 %v1585, %v2152
    %v2297 = vmul.f32 %v1589, %v2154
    %v2298 = vmul.f32 %v1591, %v2156
    %v2299 = vmul.f32 %v1593, %v2158
    %v2300 = vmul.f32 %v1595, %v2160
    %v2301 = vmul.f32 %v1599, %v2162
    %v2302 = vmul.f32 %v1601, %v2164
    %v2303 = vmul.f32 %v1603, %v2166
    %v2304 = vmul.f32 %v1605, %v2168
    %v2305 = vmul.f32 %v1609, %v2170
    %v2306 = vmul.f32 %v1611, %v2172
    %v2307 = vmul.f32 %v1613, %v2174
    %v2308 = vmul.f32 %v1615, %v2176
    %v2309 = vmul.f32 %v1619, %v2178
    %v2310 = vmul.f32 %v1621, %v2180
    %v2311 = vmul.f32 %v1623, %v2182
    %v2312 = vmul.f32 %v1625, %v2184
    %v2313 = vmul.f32 %v1629, %v2186
    %v2314 = vmul.f32 %v1631, %v2188
    %v2315 = vmul.f32 %v1633, %v2190
    %v2316 = vmul.f32 %v1635, %v2192
    %v2317 = vmul.f32 %v1639, %v2194
    %v2318 = vmul.f32 %v1641, %v2196
    %v2319 = vmul.f32 %v1643, %v2198
    %v2320 = vmul.f32 %v1645, %v2200
    %v2321 = vmul.f32 %v1649, %v2202
    %v2322 = vmul.f32 %v1651, %v2204
    %v2323 = vmul.f32 %v1653, %v2206
    %v2324 = vmul.f32 %v1655, %v2208
    %v2325 = vmul.f32 %v1659, %v2210
    %v2326 = vmul.f32 %v1661, %v2212
    %v2327 = vmul.f32 %v1663, %v2214
    %v2328 = vmul.f32 %v1665, %v2216
    %v2329 = vmul.f32 %v1669, %v2218
    %v2330 = vmul.f32 %v1671, %v2220
    %v2331 = vmul.f32 %v1673, %v2222
    %v2332 = vmul.f32 %v1675, %v2224
    %v2333 = vmul.f32 %v1679, %v2226
    %v2334 = vmul.f32 %v1681, %v2228
    %v2335 = vmul.f32 %v1683, %v2230
    %v2336 = vmul.f32 %v1685, %v2232
    %v2337 = vmul.f32 %v1689, %v2234
    %v2338 = vmul.f32 %v1691, %v2236
    %v2339 = vmul.f32 %v1693, %v2238
    %v2340 = vmul.f32 %v1695, %v2240
    %v2341 = vmul.f32 %v1699, %v2242
    %v2342 = vmul.f32 %v1701, %v2244
    %v2343 = vmul.f32 %v1703, %v2246
    %v2344 = vmul.f32 %v1705, %v2248
    %v2345 = vmul.f32 %v1709, %v2250
    %v2346 = vmul.f32 %v1711, %v2252
    %v2347 = vmul.f32 %v1713, %v2254
    %v2348 = vmul.f32 %v1715, %v2256
    %v2349 = vmul.f32 %v1719, %v2258
    %v2350 = vmul.f32 %v1721, %v2260
    %v2351 = vmul.f32 %v1723, %v2262
    %v2352 = vmul.f32 %v1725, %v2264
    %v2353 = vmul.f32 %v1729, %v2266
    %v2354 = vmul.f32 %v1731, %v2268
    %v2355 = vmul.f32 %v1733, %v2270
    %v2356 = vmul.f32 %v1735, %v2272
    %v2357 = vmul.f32 %v1739, %v2274
    %v2358 = vmul.f32 %v1741, %v2276
    %v2359 = vmul.f32 %v1743, %v2278
    %v2360 = vmul.f32 %v1745, %v2280
    %v2361 = vmul.f32 %v1749, %v2282
    %v2362 = vmul.f32 %v1751, %v2284
    %v2363 = vmul.f32 %v1753, %v2286
    %v2364 = vmul.f32 %v1755, %v2288
    %v2365 = vpack.c.bf16 %v2291, %v2289
    %v2366 = vpack.c.bf16 %v2292, %v2290
    %v2367 = vpack.c.bf16 %v2295, %v2293
    %v2368 = vpack.c.bf16 %v2296, %v2294
    %v2369 = vpack.c.bf16 %v2299, %v2297
    %v2370 = vpack.c.bf16 %v2300, %v2298
    %v2371 = vpack.c.bf16 %v2303, %v2301
    %v2372 = vpack.c.bf16 %v2304, %v2302
    %v2373 = vpack.c.bf16 %v2307, %v2305
    %v2374 = vpack.c.bf16 %v2308, %v2306
    %v2375 = vpack.c.bf16 %v2311, %v2309
    %v2376 = vpack.c.bf16 %v2312, %v2310
    %v2377 = vpack.c.bf16 %v2315, %v2313
    %v2378 = vpack.c.bf16 %v2316, %v2314
    %v2379 = vpack.c.bf16 %v2319, %v2317
    %v2380 = vpack.c.bf16 %v2320, %v2318
    %v2381 = vpack.c.bf16 %v2323, %v2321
    %v2382 = vpack.c.bf16 %v2324, %v2322
    %v2383 = vpack.c.bf16 %v2327, %v2325
    %v2384 = vpack.c.bf16 %v2328, %v2326
    %v2385 = vpack.c.bf16 %v2331, %v2329
    %v2386 = vpack.c.bf16 %v2332, %v2330
    %v2387 = vpack.c.bf16 %v2335, %v2333
    %v2388 = vpack.c.bf16 %v2336, %v2334
    %v2389 = vpack.c.bf16 %v2339, %v2337
    %v2390 = vpack.c.bf16 %v2340, %v2338
    %v2391 = vpack.c.bf16 %v2343, %v2341
    %v2392 = vpack.c.bf16 %v2344, %v2342
    %v2393 = vpack.c.bf16 %v2347, %v2345
    %v2394 = vpack.c.bf16 %v2348, %v2346
    %v2395 = vpack.c.bf16 %v2351, %v2349
    %v2396 = vpack.c.bf16 %v2352, %v2350
    %v2397 = vpack.c.bf16 %v2355, %v2353
    %v2398 = vpack.c.bf16 %v2356, %v2354
    %v2399 = vpack.c.bf16 %v2359, %v2357
    %v2400 = vpack.c.bf16 %v2360, %v2358
    %v2401 = vpack.c.bf16 %v2363, %v2361
    %v2402 = vpack.c.bf16 %v2364, %v2362
    %v2403 = vld [vmem:[#allocation8] sm:$0xf]
    %v2404 = vld [vmem:[#allocation8 + $0x4] sm:$0xf]
    %v2405 = vld [vmem:[#allocation8 + $0x8] sm:$0xf]
    %v2406 = vld [vmem:[#allocation8 + $0xc] sm:$0xf]
    %v2407 = vld [vmem:[#allocation8 + $0x10] sm:$0xf]
    %v2408 = vld [vmem:[#allocation8 + $0x14] sm:$0xf]
    %v2409 = vld [vmem:[#allocation8 + $0x18] sm:$0xf]
    %v2410 = vld [vmem:[#allocation8 + $0x1c] sm:$0xf]
    %v2411 = vld [vmem:[#allocation8 + $0x20] sm:$0xf]
    %v2412 = vld [vmem:[#allocation8 + $0x24] sm:$0xf]
    %v2413 = vld [vmem:[#allocation8 + $0x28] sm:$0xf]
    %v2414 = vld [vmem:[#allocation8 + $0x2c] sm:$0xf]
    %v2415 = vld [vmem:[#allocation8 + $0x30] sm:$0xf]
    %v2416 = vld [vmem:[#allocation8 + $0x34] sm:$0xf]
    %v2417 = vld [vmem:[#allocation8 + $0x38] sm:$0xf]
    %v2418 = vld [vmem:[#allocation8 + $0x3c] sm:$0xf]
    %v2419 = vld [vmem:[#allocation8 + $0x40] sm:$0xf]
    %v2420 = vld [vmem:[#allocation8 + $0x44] sm:$0xf]
    %v2421 = vld [vmem:[#allocation8 + $0x48] sm:$0xf]
    %v2422 = vld [vmem:[#allocation8 + $0x4c] sm:$0xf]
    %v2423 = vld [vmem:[#allocation8 + $0x50] sm:$0xf]
    %v2424 = vld [vmem:[#allocation8 + $0x54] sm:$0xf]
    %v2425 = vld [vmem:[#allocation8 + $0x58] sm:$0xf]
    %v2426 = vld [vmem:[#allocation8 + $0x5c] sm:$0xf]
    %v2427 = vld [vmem:[#allocation8 + $0x60] sm:$0xf]
    %v2428 = vld [vmem:[#allocation8 + $0x64] sm:$0xf]
    %v2429 = vld [vmem:[#allocation8 + $0x68] sm:$0xf]
    %v2430 = vld [vmem:[#allocation8 + $0x6c] sm:$0xf]
    %v2431 = vld [vmem:[#allocation8 + $0x70] sm:$0xf]
    %v2432 = vld [vmem:[#allocation8 + $0x74] sm:$0xf]
    %v2433 = vld [vmem:[#allocation8 + $0x78] sm:$0xf]
    %v2434 = vld [vmem:[#allocation8 + $0x7c] sm:$0xf]
    %v2435 = vld [vmem:[%s7] sm:$0x1]
    %v2437 = vlaneseq
    %v2438 = vshrl.u32 %v2437, 7
    %v2439 = vsub.s32 0, %v2438
    %v2440 = vrot.slane %v2435, %v2439
    %v2474 = vunpack.c.l.b16 %v2403
    %v2475 = vunpack.c.l.b16 %v2404
    %v2476 = vunpack.c.l.b16 %v2405
    %v2477 = vunpack.c.l.b16 %v2406
    %v2478 = vunpack.c.l.b16 %v2407
    %v2479 = vunpack.c.l.b16 %v2408
    %v2480 = vunpack.c.l.b16 %v2409
    %v2481 = vunpack.c.l.b16 %v2410
    %v2482 = vunpack.c.l.b16 %v2411
    %v2483 = vunpack.c.l.b16 %v2412
    %v2484 = vunpack.c.l.b16 %v2413
    %v2485 = vunpack.c.l.b16 %v2414
    %v2486 = vunpack.c.l.b16 %v2415
    %v2487 = vunpack.c.l.b16 %v2416
    %v2488 = vunpack.c.l.b16 %v2417
    %v2489 = vunpack.c.l.b16 %v2418
    %v2490 = vunpack.c.l.b16 %v2419
    %v2491 = vunpack.c.l.b16 %v2420
    %v2492 = vunpack.c.l.b16 %v2421
    %v2493 = vunpack.c.l.b16 %v2422
    %v2494 = vunpack.c.l.b16 %v2423
    %v2495 = vunpack.c.l.b16 %v2424
    %v2496 = vunpack.c.l.b16 %v2425
    %v2497 = vunpack.c.l.b16 %v2426
    %v2498 = vunpack.c.l.b16 %v2427
    %v2499 = vunpack.c.l.b16 %v2428
    %v2500 = vunpack.c.l.b16 %v2429
    %v2501 = vunpack.c.l.b16 %v2430
    %v2502 = vunpack.c.l.b16 %v2431
    %v2503 = vunpack.c.l.b16 %v2432
    %v2504 = vunpack.c.l.b16 %v2433
    %v2505 = vunpack.c.l.b16 %v2434
    %v2506 = vpack.c.b16 %v2475, %v2474
    %v2507 = vpack.c.b16 %v2477, %v2476
    %v2508 = vpack.c.b16 %v2479, %v2478
    %v2509 = vpack.c.b16 %v2481, %v2480
    %v2510 = vpack.c.b16 %v2483, %v2482
    %v2511 = vpack.c.b16 %v2485, %v2484
    %v2512 = vpack.c.b16 %v2487, %v2486
    %v2513 = vpack.c.b16 %v2489, %v2488
    %v2514 = vpack.c.b16 %v2491, %v2490
    %v2515 = vpack.c.b16 %v2493, %v2492
    %v2516 = vpack.c.b16 %v2495, %v2494
    %v2517 = vpack.c.b16 %v2497, %v2496
    %v2518 = vpack.c.b16 %v2499, %v2498
    %v2519 = vpack.c.b16 %v2501, %v2500
    %v2520 = vpack.c.b16 %v2503, %v2502
    %v2521 = vpack.c.b16 %v2505, %v2504
    %2538 = vmatprep.subr.bf16.mxu0 0
    %2539 = vmatpush1.bf16.msra.mxu0 %v2506
    %2540 = vmatprep.subr.bf16.mxu0 0
    %2541 = vmatpush1.bf16.msra.mxu0 %v2507
    %2542 = vmatprep.subr.bf16.mxu0 0
    %2543 = vmatpush1.bf16.msra.mxu0 %v2508
    %2544 = vmatprep.subr.bf16.mxu0 0
    %2545 = vmatpush1.bf16.msra.mxu0 %v2509
    %2546 = vmatprep.subr.bf16.mxu0 0
    %2547 = vmatpush1.bf16.msra.mxu0 %v2510
    %2548 = vmatprep.subr.bf16.mxu0 0
    %2549 = vmatpush1.bf16.msra.mxu0 %v2511
    %2550 = vmatprep.subr.bf16.mxu0 0
    %2551 = vmatpush1.bf16.msra.mxu0 %v2512
    %2552 = vmatprep.subr.bf16.mxu0 0
    %2553 = vmatpush1.bf16.msra.mxu0 %v2513
    %2554 = vmatprep.subr.bf16.mxu0 0
    %2555 = vmatpush1.bf16.msra.mxu0 %v2514
    %2556 = vmatprep.subr.bf16.mxu0 0
    %2557 = vmatpush1.bf16.msra.mxu0 %v2515
    %2558 = vmatprep.subr.bf16.mxu0 0
    %2559 = vmatpush1.bf16.msra.mxu0 %v2516
    %2560 = vmatprep.subr.bf16.mxu0 0
    %2561 = vmatpush1.bf16.msra.mxu0 %v2517
    %2562 = vmatprep.subr.bf16.mxu0 0
    %2563 = vmatpush1.bf16.msra.mxu0 %v2518
    %2564 = vmatprep.subr.bf16.mxu0 0
    %2565 = vmatpush1.bf16.msra.mxu0 %v2519
    %2566 = vmatprep.subr.bf16.mxu0 0
    %2567 = vmatpush1.bf16.msra.mxu0 %v2520
    %2568 = vmatprep.subr.bf16.mxu0 0
    %2569 = vmatpush1.bf16.msra.mxu0 %v2521
    %2570 = vmatprep.mubr.bf16.mxu0 %v2366
    %2571 = vmatmul.mubr.bf16.gmra.mrb[0].mxu0 %v2365
    %v2572 = vpop.f32.mrb[0].mxu0
    %v2573 = vadd.f32 %v2440, %v2572
    %v2574 = vpop.f32.mrb[0].mxu0
    %v2575 = vpop.f32.mrb[0].mxu0
    %v2576 = vadd.f32 %v2440, %v2575
    %v2577 = vpop.f32.mrb[0].mxu0
    %2578 = vmatprep.mubr.bf16.mxu0 %v2368
    %2579 = vmatmul.mubr.bf16.gmra.mrb[0].mxu0 %v2367
    %v2580 = vpop.f32.mrb[0].mxu0
    %v2581 = vadd.f32 %v2440, %v2580
    %v2582 = vpop.f32.mrb[0].mxu0
    %v2583 = vpop.f32.mrb[0].mxu0
    %v2584 = vadd.f32 %v2440, %v2583
    %v2585 = vpop.f32.mrb[0].mxu0
    %2586 = vmatprep.mubr.bf16.mxu0 %v2370
    %2587 = vmatmul.mubr.bf16.gmra.mrb[0].mxu0 %v2369
    %v2588 = vpop.f32.mrb[0].mxu0
    %v2589 = vadd.f32 %v2440, %v2588
    %v2590 = vpop.f32.mrb[0].mxu0
    %v2591 = vpop.f32.mrb[0].mxu0
    %v2592 = vadd.f32 %v2440, %v2591
    %v2593 = vpop.f32.mrb[0].mxu0
    %2594 = vmatprep.mubr.bf16.mxu0 %v2372
    %2595 = vmatmul.mubr.bf16.gmra.mrb[0].mxu0 %v2371
    %v2596 = vpop.f32.mrb[0].mxu0
    %v2597 = vadd.f32 %v2440, %v2596
    %v2598 = vpop.f32.mrb[0].mxu0
    %v2599 = vpop.f32.mrb[0].mxu0
    %v2600 = vadd.f32 %v2440, %v2599
    %v2601 = vpop.f32.mrb[0].mxu0
    %2602 = vmatprep.mubr.bf16.mxu0 %v2374
    %2603 = vmatmul.mubr.bf16.gmra.mrb[0].mxu0 %v2373
    %v2604 = vpop.f32.mrb[0].mxu0
    %v2605 = vadd.f32 %v2440, %v2604
    %v2606 = vpop.f32.mrb[0].mxu0
    %v2607 = vpop.f32.mrb[0].mxu0
    %v2608 = vadd.f32 %v2440, %v2607
    %v2609 = vpop.f32.mrb[0].mxu0
    %2610 = vmatprep.mubr.bf16.mxu0 %v2376
    %2611 = vmatmul.mubr.bf16.gmra.mrb[0].mxu0 %v2375
    %v2612 = vpop.f32.mrb[0].mxu0
    %v2613 = vadd.f32 %v2440, %v2612
    %v2614 = vpop.f32.mrb[0].mxu0
    %v2615 = vpop.f32.mrb[0].mxu0
    %v2616 = vadd.f32 %v2440, %v2615
    %v2617 = vpop.f32.mrb[0].mxu0
    %2618 = vmatprep.mubr.bf16.mxu0 %v2378
    %2619 = vmatmul.mubr.bf16.gmra.mrb[0].mxu0 %v2377
    %v2620 = vpop.f32.mrb[0].mxu0
    %v2621 = vadd.f32 %v2440, %v2620
    %v2622 = vpop.f32.mrb[0].mxu0
    %v2623 = vpop.f32.mrb[0].mxu0
    %v2624 = vadd.f32 %v2440, %v2623
    %v2625 = vpop.f32.mrb[0].mxu0
    %2626 = vmatprep.mubr.bf16.mxu0 %v2380
    %2627 = vmatmul.mubr.bf16.gmra.mrb[0].mxu0 %v2379
    %v2628 = vpop.f32.mrb[0].mxu0
    %v2629 = vadd.f32 %v2440, %v2628
    %v2630 = vpop.f32.mrb[0].mxu0
    %v2631 = vpop.f32.mrb[0].mxu0
    %v2632 = vadd.f32 %v2440, %v2631
    %v2633 = vpop.f32.mrb[0].mxu0
    %2634 = vmatprep.mubr.bf16.mxu0 %v2382
    %2635 = vmatmul.mubr.bf16.gmra.mrb[0].mxu0 %v2381
    %v2636 = vpop.f32.mrb[0].mxu0
    %v2637 = vadd.f32 %v2440, %v2636
    %v2638 = vpop.f32.mrb[0].mxu0
    %v2639 = vpop.f32.mrb[0].mxu0
    %v2640 = vadd.f32 %v2440, %v2639
    %v2641 = vpop.f32.mrb[0].mxu0
    %2642 = vmatprep.mubr.bf16.mxu0 %v2384
    %2643 = vmatmul.mubr.bf16.gmra.mrb[0].mxu0 %v2383
    %v2644 = vpop.f32.mrb[0].mxu0
    %v2645 = vadd.f32 %v2440, %v2644
    %v2646 = vpop.f32.mrb[0].mxu0
    %v2647 = vpop.f32.mrb[0].mxu0
    %v2648 = vadd.f32 %v2440, %v2647
    %v2649 = vpop.f32.mrb[0].mxu0
    %2650 = vmatprep.mubr.bf16.mxu0 %v2386
    %2651 = vmatmul.mubr.bf16.gmra.mrb[0].mxu0 %v2385
    %v2652 = vpop.f32.mrb[0].mxu0
    %v2653 = vadd.f32 %v2440, %v2652
    %v2654 = vpop.f32.mrb[0].mxu0
    %v2655 = vpop.f32.mrb[0].mxu0
    %v2656 = vadd.f32 %v2440, %v2655
    %v2657 = vpop.f32.mrb[0].mxu0
    %2658 = vmatprep.mubr.bf16.mxu0 %v2388
    %2659 = vmatmul.mubr.bf16.gmra.mrb[0].mxu0 %v2387
    %v2660 = vpop.f32.mrb[0].mxu0
    %v2661 = vadd.f32 %v2440, %v2660
    %v2662 = vpop.f32.mrb[0].mxu0
    %v2663 = vpop.f32.mrb[0].mxu0
    %v2664 = vadd.f32 %v2440, %v2663
    %v2665 = vpop.f32.mrb[0].mxu0
    %2666 = vmatprep.mubr.bf16.mxu0 %v2390
    %2667 = vmatmul.mubr.bf16.gmra.mrb[0].mxu0 %v2389
    %v2668 = vpop.f32.mrb[0].mxu0
    %v2669 = vadd.f32 %v2440, %v2668
    %v2670 = vpop.f32.mrb[0].mxu0
    %v2671 = vpop.f32.mrb[0].mxu0
    %v2672 = vadd.f32 %v2440, %v2671
    %v2673 = vpop.f32.mrb[0].mxu0
    %2674 = vmatprep.mubr.bf16.mxu0 %v2392
    %2675 = vmatmul.mubr.bf16.gmra.mrb[0].mxu0 %v2391
    %v2676 = vpop.f32.mrb[0].mxu0
    %v2677 = vadd.f32 %v2440, %v2676
    %v2678 = vpop.f32.mrb[0].mxu0
    %v2679 = vpop.f32.mrb[0].mxu0
    %v2680 = vadd.f32 %v2440, %v2679
    %v2681 = vpop.f32.mrb[0].mxu0
    %2682 = vmatprep.mubr.bf16.mxu0 %v2394
    %2683 = vmatmul.mubr.bf16.gmra.mrb[0].mxu0 %v2393
    %v2684 = vpop.f32.mrb[0].mxu0
    %v2685 = vadd.f32 %v2440, %v2684
    %v2686 = vpop.f32.mrb[0].mxu0
    %v2687 = vpop.f32.mrb[0].mxu0
    %v2688 = vadd.f32 %v2440, %v2687
    %v2689 = vpop.f32.mrb[0].mxu0
    %2690 = vmatprep.mubr.bf16.mxu0 %v2396
    %2691 = vmatmul.mubr.bf16.gmra.mrb[0].mxu0 %v2395
    %v2692 = vpop.f32.mrb[0].mxu0
    %v2693 = vadd.f32 %v2440, %v2692
    %v2694 = vpop.f32.mrb[0].mxu0
    %v2695 = vpop.f32.mrb[0].mxu0
    %v2696 = vadd.f32 %v2440, %v2695
    %v2697 = vpop.f32.mrb[0].mxu0
    %2698 = vmatprep.mubr.bf16.mxu0 %v2398
    %2699 = vmatmul.mubr.bf16.gmra.mrb[0].mxu0 %v2397
    %v2700 = vpop.f32.mrb[0].mxu0
    %v2701 = vadd.f32 %v2440, %v2700
    %v2702 = vpop.f32.mrb[0].mxu0
    %v2703 = vpop.f32.mrb[0].mxu0
    %v2704 = vadd.f32 %v2440, %v2703
    %v2705 = vpop.f32.mrb[0].mxu0
    %2706 = vmatprep.mubr.bf16.mxu0 %v2400
    %2707 = vmatmul.mubr.bf16.gmra.mrb[0].mxu0 %v2399
    %v2708 = vpop.f32.mrb[0].mxu0
    %v2709 = vadd.f32 %v2440, %v2708
    %v2710 = vpop.f32.mrb[0].mxu0
    %v2711 = vpop.f32.mrb[0].mxu0
    %v2712 = vadd.f32 %v2440, %v2711
    %v2713 = vpop.f32.mrb[0].mxu0
    %2714 = vmatprep.mubr.bf16.mxu0 %v2402
    %2715 = vmatmul.mubr.bf16.gmra.mrb[0].mxu0 %v2401
    %v2716 = vpop.f32.mrb[0].mxu0
    %v2717 = vadd.f32 %v2440, %v2716
    %v2718 = vpop.f32.mrb[0].mxu0
    %v2719 = vpop.f32.mrb[0].mxu0
    %v2720 = vadd.f32 %v2440, %v2719
    %v2721 = vpop.f32.mrb[0].mxu0
    %2722 = vdwg.mxu0
    %2723 = vst [vmem:[#allocation10] sm:$0xff] %v2573
    %2724 = vst [vmem:[#allocation10 + $0x8] sm:$0xff] %v2576
    %2725 = vst [vmem:[#allocation10 + $0x10] sm:$0xff] %v2581
    %2726 = vst [vmem:[#allocation10 + $0x18] sm:$0xff] %v2584
    %2727 = vst [vmem:[#allocation10 + $0x20] sm:$0xff] %v2589
    %2728 = vst [vmem:[#allocation10 + $0x28] sm:$0xff] %v2592
    %2729 = vst [vmem:[#allocation10 + $0x30] sm:$0xff] %v2597
    %2730 = vst [vmem:[#allocation10 + $0x38] sm:$0xff] %v2600
    %2731 = vst [vmem:[#allocation10 + $0x40] sm:$0xff] %v2605
    %2732 = vst [vmem:[#allocation10 + $0x48] sm:$0xff] %v2608
    %2733 = vst [vmem:[#allocation10 + $0x50] sm:$0xff] %v2613
    %2734 = vst [vmem:[#allocation10 + $0x58] sm:$0xff] %v2616
    %2735 = vst [vmem:[#allocation10 + $0x60] sm:$0xff] %v2621
    %2736 = vst [vmem:[#allocation10 + $0x68] sm:$0xff] %v2624
    %2737 = vst [vmem:[#allocation10 + $0x70] sm:$0xff] %v2629
    %2738 = vst [vmem:[#allocation10 + $0x78] sm:$0xff] %v2632
    %2739 = vst [vmem:[#allocation10 + $0x80] sm:$0xff] %v2637
    %2740 = vst [vmem:[#allocation10 + $0x88] sm:$0xff] %v2640
    %2741 = vst [vmem:[#allocation10 + $0x90] sm:$0xff] %v2645
    %2742 = vst [vmem:[#allocation10 + $0x98] sm:$0xff] %v2648
    %2743 = vst [vmem:[#allocation10 + $0xa0] sm:$0xff] %v2653
    %2744 = vst [vmem:[#allocation10 + $0xa8] sm:$0xff] %v2656
    %2745 = vst [vmem:[#allocation10 + $0xb0] sm:$0xff] %v2661
    %2746 = vst [vmem:[#allocation10 + $0xb8] sm:$0xff] %v2664
    %2747 = vst [vmem:[#allocation10 + $0xc0] sm:$0xff] %v2669
    %2748 = vst [vmem:[#allocation10 + $0xc8] sm:$0xff] %v2672
    %2749 = vst [vmem:[#allocation10 + $0xd0] sm:$0xff] %v2677
    %2750 = vst [vmem:[#allocation10 + $0xd8] sm:$0xff] %v2680
    %2751 = vst [vmem:[#allocation10 + $0xe0] sm:$0xff] %v2685
    %2752 = vst [vmem:[#allocation10 + $0xe8] sm:$0xff] %v2688
    %2753 = vst [vmem:[#allocation10 + $0xf0] sm:$0xff] %v2693
    %2754 = vst [vmem:[#allocation10 + $0xf8] sm:$0xff] %v2696
    %2755 = vst [vmem:[#allocation10 + $0x100] sm:$0xff] %v2701
    %2756 = vst [vmem:[#allocation10 + $0x108] sm:$0xff] %v2704
    %2757 = vst [vmem:[#allocation10 + $0x110] sm:$0xff] %v2709
    %2758 = vst [vmem:[#allocation10 + $0x118] sm:$0xff] %v2712
    %2759 = vst [vmem:[#allocation10 + $0x120] sm:$0xff] %v2717
    %2760 = vst [vmem:[#allocation10 + $0x128] sm:$0xff] %v2720
    // Predicated region
    $region50: #{tpu_custom_call.1} parent=1 // pred_check
      _
    $region51: #{tpu_custom_call.1} parent=1 // pred_check_branch
      %2762 = sbr.rel (0) target = $region53
    $region52: #{tpu_custom_call.1} parent=1 // pred_region
      %s2764 = ssub.s32 4864, 4864
      %2765 = vsyncadd [#allocation4], %s2764
      %s2766 = sshll.u32 [#allocation10], 4
      %s2767 = int_to_ptr.vmem [resolvable:$true] %s2766
      %2772 = dma.vmem_to_hbm [thread:$0]  %s2767, 4864, %s8, [#allocation4], 128, 128, 8
    $region53: #{tpu_custom_call.1} parent=1 // pred_fallthru
      _
    // Predicated region
    $region54: #{tpu_custom_call.1} parent=1 // pred_check
      _
    $region55: #{tpu_custom_call.1} parent=1 // pred_check_branch
      %2774 = sbr.rel (0) target = $region57
    $region56: #{tpu_custom_call.1} parent=1 // pred_region
      %2775 = dma.done [#allocation4], 4864
    $region57: #{tpu_custom_call.1} parent=1 // pred_fallthru
      _
    %2776 = vsyncpa [#allocation3], 1
    %2777 = vsyncpa [#allocation6], 1
    %2778 = vsyncpa [#allocation9], 1
    %2779 = vsyncpa [#allocation4], 1

</llo_original>
